<compile_context>
chip_gen: v6e
topology: v6e:2x2x1
jax: 0.10.0
libtpu: 0.0.40
codegen_flags: <defaults>
</compile_context>

<pallas_src>
import functools

import jax
import jax.numpy as jnp
from jax.experimental import pallas as pl
from jax.experimental.pallas import tpu as pltpu

KSIZE = 3          # conv kernel size ('same' padding)
BN_EPS = 1e-5
NUM_CONV_LAYERS = 3


# ---------------------------------------------------------------------------
# Fused kernel: pre_conv + 3 conv blocks + mean(T) + fc1 + ReLU + fc2
# ---------------------------------------------------------------------------
def model3_fused_kernel(x_ref, wp_ref, sp_ref, wc_ref, sc_ref,
                        w1_ref, b1_ref, w2_ref, b2_ref, o_ref):
    # x_ref : (M, F) f32, M = b_blk*T (batch-major, time contiguous)
    # wp_ref: (3, F, H)      bf16 per-tap pre-conv weights (BN folded)
    # sp_ref: (1, H)         f32 folded bias + BN shift
    # wc_ref: (3*NL, H, H)   bf16 per-tap conv-block weights (BN folded)
    # sc_ref: (NL, 1, H)     f32 folded shifts
    # w1_ref: (H, H2)  bf16     b1_ref: (1, H2)  f32
    # w2_ref: (H2, OUT_PAD) bf16 (zero-padded lanes)   b2_ref: (1, OUT_PAD) f32
    # o_ref : (b_blk, OUT_PAD) f32
    m = x_ref.shape[0]
    b_blk = o_ref.shape[0]
    t_len = m // b_blk
    h = sp_ref.shape[-1]
    n_layers = sc_ref.shape[0]

    # Boundary masks for the 'same'-padding taps, hoisted ONCE (JAX does not
    # CSE broadcast_in_dim, so they must not be rebuilt inside the layer loop).
    # They also zero the batch-boundary wraparound rows of the flat layout.
    t_of_row = jax.lax.broadcasted_iota(jnp.int32, (m, h), 0) % t_len
    not_first = t_of_row > 0               # row is not timestep 0
    not_last = t_of_row < (t_len - 1)      # row is not timestep T-1

    def conv_bn_relu(x2d, w_prev, w_cent, w_next, shift):
        # x2d: (M, Cin) bf16; w_*: (Cin, H) bf16; shift: (1, H) f32.
        # Three per-tap matmuls (no im2col lane concat).  The +-1 taps are
        # applied by rotating the f32 outputs along time (XLU) and masking the
        # wrapped rows — no shifted activation copies.
        y_p = jnp.dot(x2d, w_prev, preferred_element_type=jnp.float32)  # -> out[t+1]
        y_c = jnp.dot(x2d, w_cent, preferred_element_type=jnp.float32)  # -> out[t]
        y_n = jnp.dot(x2d, w_next, preferred_element_type=jnp.float32)  # -> out[t-1]
        acc = y_c + shift                                               # folded bias+BN
        acc = acc + jnp.where(not_first, pltpu.roll(y_p, 1, axis=0), 0.0)
        acc = acc + jnp.where(not_last, pltpu.roll(y_n, m - 1, axis=0), 0.0)
        # ReLU, then a single bf16 cast per layer (activations stay bf16).
        return jnp.maximum(acc, 0.0).astype(jnp.bfloat16)

    x = x_ref[...].astype(jnp.bfloat16)                                 # one input cast
    x = conv_bn_relu(x, wp_ref[0], wp_ref[1], wp_ref[2], sp_ref[...])   # pre_conv
    for l in range(n_layers):                                           # conv blocks
        x = conv_bn_relu(x, wc_ref[3 * l], wc_ref[3 * l + 1],
                         wc_ref[3 * l + 2], sc_ref[l])                  # Dropout = id (eval)

    # torch.mean(logits, dim=-1) over time, then fc1 + ReLU + fc2 (dropout = id).
    xm = x.astype(jnp.float32).reshape(b_blk, t_len, h)
    mean = jnp.sum(xm, axis=1) * (1.0 / t_len)                          # (b_blk, H) f32
    hid = jnp.dot(mean.astype(w1_ref.dtype), w1_ref[...],
                  preferred_element_type=jnp.float32) + b1_ref[...]
    hid = jnp.maximum(hid, 0.0)
    out = jnp.dot(hid.astype(w2_ref.dtype), w2_ref[...],
                  preferred_element_type=jnp.float32) + b2_ref[...]
    o_ref[...] = out                                                    # lane-dense store


# ---------------------------------------------------------------------------
# Parameter init (deterministic, PyTorch-default-style uniform bounds)
# ---------------------------------------------------------------------------
def _conv_params(key, cin, cout):
    bound = 1.0 / (cin * KSIZE) ** 0.5
    kw, kb = jax.random.split(key)
    return dict(
        w=jax.random.uniform(kw, (KSIZE, cin, cout), jnp.float32, -bound, bound),
        b=jax.random.uniform(kb, (cout,), jnp.float32, -bound, bound),
        gamma=jnp.ones((cout,), jnp.float32),
        beta=jnp.zeros((cout,), jnp.float32),
        mean=jnp.zeros((cout,), jnp.float32),   # fresh BN running stats (eval)
        var=jnp.ones((cout,), jnp.float32),
    )


def _linear_init(key, cin, cout):
    bound = 1.0 / cin ** 0.5
    kw, kb = jax.random.split(key)
    w = jax.random.uniform(kw, (cin, cout), jnp.float32, -bound, bound)
    b = jax.random.uniform(kb, (1, cout), jnp.float32, -bound, bound)
    return w, b


def init_params(key, feature_dim, conv_hidden_dim, out_dim, num_conv_layers=NUM_CONV_LAYERS):
    keys = jax.random.split(key, num_conv_layers + 3)
    params = {
        "pre": _conv_params(keys[0], feature_dim, conv_hidden_dim),
        "convs": [_conv_params(keys[1 + i], conv_hidden_dim, conv_hidden_dim)
                  for i in range(num_conv_layers)],
    }
    h2 = int(conv_hidden_dim * 0.5)
    params["fc1"] = _linear_init(keys[-2], conv_hidden_dim, h2)
    params["fc2"] = _linear_init(keys[-1], h2, out_dim)
    return params


def _fold_conv(p):
    """Fold conv bias + eval-mode BatchNorm into per-tap bf16 weights + f32 shift."""
    scale = p["gamma"] / jnp.sqrt(p["var"] + BN_EPS)
    w = (p["w"] * scale[None, None, :]).astype(jnp.bfloat16)   # (K, Cin, Cout), tap-major
    s = (p["b"] * scale + p["beta"] - p["mean"] * scale).reshape(1, -1).astype(jnp.float32)
    return w, s


def prepare_params(params):
    """One-time host prep: fold BN, keep per-tap weight layout, pad head to 128 lanes."""
    wp, sp = _fold_conv(params["pre"])                         # (3, F, H), (1, H)
    wcs, scs = zip(*[_fold_conv(p) for p in params["convs"]])
    wc = jnp.concatenate(wcs, axis=0)                          # (3*NL, H, H) bf16, layer-major
    sc = jnp.stack(scs)                                        # (NL, 1, H)   f32
    w1, b1 = params["fc1"]
    w2, b2 = params["fc2"]
    out_dim = w2.shape[1]
    out_pad = ((out_dim + 127) // 128) * 128
    w2p = jnp.pad(w2, ((0, 0), (0, out_pad - out_dim))).astype(jnp.bfloat16)
    b2p = jnp.pad(b2, ((0, 0), (0, out_pad - out_dim)))
    return (wp, sp, wc, sc, w1.astype(jnp.bfloat16), b1, w2p, b2p)


# ---------------------------------------------------------------------------
# Tiling / VMEM heuristics
# ---------------------------------------------------------------------------
def _pick_batch_tile(batch, t_len):
    """Batch rows per grid step: target M = b_blk*T >= 256 (fills the 256-wide
    MXU on v6e/v7x), b_blk a multiple of 8 (sublane-aligned output tile),
    capped at 32, and >= 2 grid steps whenever the batch allows (megacore /
    dual-TC sharding of the parallel axis)."""
    if batch <= 8:
        return batch                        # single tile; block dims == full dims
    b_blk = max(8, -(-256 // t_len))        # ceil(256 / T)
    b_blk = ((b_blk + 7) // 8) * 8
    b_blk = min(b_blk, 32)
    return batch if batch <= b_blk else b_blk


def _vmem_limit_bytes():
    # ~half of physical VMEM: 64 MiB on 128-MiB parts (v5e/v6e, whose scoped
    # defaults of 16/32 MiB are too small), 32 MiB on v7x (64 MiB physical).
    try:
        cap = int(pltpu.get_tpu_info().vmem_capacity_bytes)
    except Exception:
        cap = 64 * 1024 * 1024
    return int(min(64 * 1024 * 1024, cap // 2))


# ---------------------------------------------------------------------------
# Forward (eval mode) — single fused pallas_call
# ---------------------------------------------------------------------------
@functools.partial(jax.jit, static_argnames=("out_dim",))
def model3_forward(feature, folded, *, out_dim):
    # feature: (B, T, feature_dim); PyTorch transpose(-1,-2) is identity in
    # our channels-last layout.
    wp, sp, wc, sc, w1, b1, w2, b2 = folded
    B, T, F = feature.shape
    out_pad = w2.shape[1]

    b_blk = _pick_batch_tile(B, T)
    n_b = -(-B // b_blk)
    b_padded = n_b * b_blk
    if b_padded != B:
        feature = jnp.pad(feature, ((0, b_padded - B), (0, 0), (0, 0)))
    # Flatten (B, T, F) -> (B*T, F) host-side (free row-major reshape) so the
    # kernel's per-tap matmuls run directly on M = b_blk*T rows.
    x2d = feature.reshape(b_padded * T, F)
    m_blk = b_blk * T

    out = pl.pallas_call(
        model3_fused_kernel,
        out_shape=jax.ShapeDtypeStruct((b_padded, out_pad), jnp.float32),
        grid_spec=pltpu.PrefetchScalarGridSpec(
            num_scalar_prefetch=0,
            grid=(n_b,),
            in_specs=[
                pl.BlockSpec((m_blk, F), lambda i: (i, 0)),
                # Weights: constant block index -> fetched into VMEM once.
                # TODO(synk): pipeline_mode=pl.Buffered(1) on the weight specs
                # would halve their VMEM (matters on v7x at H >= 1024); left at
                # the default here for broad jax-version compatibility.
                pl.BlockSpec(wp.shape, lambda i: (0, 0, 0)),
                pl.BlockSpec(sp.shape, lambda i: (0, 0)),
                pl.BlockSpec(wc.shape, lambda i: (0, 0, 0)),
                pl.BlockSpec(sc.shape, lambda i: (0, 0, 0)),
                pl.BlockSpec(w1.shape, lambda i: (0, 0)),
                pl.BlockSpec(b1.shape, lambda i: (0, 0)),
                pl.BlockSpec(w2.shape, lambda i: (0, 0)),
                pl.BlockSpec(b2.shape, lambda i: (0, 0)),
            ],
            out_specs=pl.BlockSpec((b_blk, out_pad), lambda i: (i, 0)),
        ),
        compiler_params=pltpu.CompilerParams(
            dimension_semantics=("parallel",),
            vmem_limit_bytes=_vmem_limit_bytes(),
        ),
    )(x2d, wp, sp, wc, sc, w1, b1, w2, b2)

    return out[:B, :out_dim]


if __name__ == "__main__":
    B, T = 2, 16
    FEATURE_DIM = 16
    CONV_HIDDEN = 128          # scaled-down stand-in for 512
    OUT_DIM = 115

    key = jax.random.PRNGKey(0)
    k_param, k_data = jax.random.split(key)
    params = init_params(k_param, FEATURE_DIM, CONV_HIDDEN, OUT_DIM)
    folded = prepare_params(params)
    feature = jax.random.normal(k_data, (B, T, FEATURE_DIM), jnp.float32)

    out = model3_forward(feature, folded, out_dim=OUT_DIM)
    jax.block_until_ready(out)
    assert out.shape == (B, OUT_DIM), out.shape
    print("KERNEL_OK")
</pallas_src>

<mosaic_0001>
module attributes {stable_mosaic.version = 11 : i64} {
  func.func @model3_fused_kernel(%arg0: i32, %arg1: memref<32x16xf32, #tpu.memory_space<vmem>>, %arg2: memref<3x16x128xbf16, #tpu.memory_space<vmem>>, %arg3: memref<1x128xf32, #tpu.memory_space<vmem>>, %arg4: memref<9x128x128xbf16, #tpu.memory_space<vmem>>, %arg5: memref<3x1x128xf32, #tpu.memory_space<vmem>>, %arg6: memref<128x64xbf16, #tpu.memory_space<vmem>>, %arg7: memref<1x64xf32, #tpu.memory_space<vmem>>, %arg8: memref<64x128xbf16, #tpu.memory_space<vmem>>, %arg9: memref<1x128xf32, #tpu.memory_space<vmem>>, %arg10: memref<2x128xf32, #tpu.memory_space<vmem>>) attributes {dimension_semantics = [#tpu.dimension_semantics<parallel>], iteration_bounds = array<i64: 1>, scalar_prefetch = 0 : i64, scratch_operands = 0 : i64, tpu.core_type = #tpu.core_type<tc>, window_params = [{transform_indices = @transform_0, window_bounds = array<i64: 32, 16>}, {pipeline_mode = #tpu.pipeline_mode<synchronous>, transform_indices = @transform_1, window_bounds = array<i64: 3, 16, 128>}, {pipeline_mode = #tpu.pipeline_mode<synchronous>, transform_indices = @transform_2, window_bounds = array<i64: 1, 128>}, {pipeline_mode = #tpu.pipeline_mode<synchronous>, transform_indices = @transform_3, window_bounds = array<i64: 9, 128, 128>}, {pipeline_mode = #tpu.pipeline_mode<synchronous>, transform_indices = @transform_4, window_bounds = array<i64: 3, 1, 128>}, {pipeline_mode = #tpu.pipeline_mode<synchronous>, transform_indices = @transform_5, window_bounds = array<i64: 128, 64>}, {pipeline_mode = #tpu.pipeline_mode<synchronous>, transform_indices = @transform_6, window_bounds = array<i64: 1, 64>}, {pipeline_mode = #tpu.pipeline_mode<synchronous>, transform_indices = @transform_7, window_bounds = array<i64: 64, 128>}, {pipeline_mode = #tpu.pipeline_mode<synchronous>, transform_indices = @transform_8, window_bounds = array<i64: 1, 128>}, {transform_indices = @transform_9, window_bounds = array<i64: 2, 128>}]} {
    %0 = tpu.iota {dimensions = array<i32: 0>} : vector<32x128xi32>
    %c16_i32 = arith.constant 16 : i32
    %c0_i32 = arith.constant 0 : i32
    %1 = arith.cmpi eq, %c16_i32, %c0_i32 : i32
    %c1_i32 = arith.constant 1 : i32
    %2 = arith.select %1, %c1_i32, %c16_i32 : i32
    %3 = vector.broadcast %2 : i32 to vector<32x128xi32>
    %4 = arith.remsi %0, %3 : vector<32x128xi32>
    %c0_i32_0 = arith.constant 0 : i32
    %5 = vector.broadcast %c0_i32_0 : i32 to vector<32x128xi32>
    %6 = arith.cmpi ne, %4, %5 : vector<32x128xi32>
    %c0_i32_1 = arith.constant 0 : i32
    %7 = vector.broadcast %c0_i32_1 : i32 to vector<32x128xi32>
    %8 = arith.cmpi slt, %4, %7 : vector<32x128xi32>
    %c0_i32_2 = arith.constant 0 : i32
    %9 = arith.cmpi slt, %2, %c0_i32_2 : i32
    %10 = vector.broadcast %9 : i1 to vector<32x128xi1>
    %11 = vector.broadcast %10 : vector<32x128xi1> to vector<32x128xi1>
    %12 = arith.xori %8, %11 : vector<32x128xi1>
    %13 = arith.andi %12, %6 : vector<32x128xi1>
    %14 = vector.broadcast %2 : i32 to vector<32x128xi32>
    %15 = arith.addi %4, %14 : vector<32x128xi32>
    %16 = arith.select %13, %15, %4 : vector<32x128xi1>, vector<32x128xi32>
    %c0_i32_3 = arith.constant 0 : i32
    %17 = vector.broadcast %c0_i32_3 : i32 to vector<32x128xi32>
    %18 = arith.cmpi sgt, %16, %17 : vector<32x128xi32>
    %c15_i32 = arith.constant 15 : i32
    %19 = vector.broadcast %c15_i32 : i32 to vector<32x128xi32>
    %20 = arith.cmpi slt, %16, %19 : vector<32x128xi32>
    %c0 = arith.constant 0 : index
    %c0_4 = arith.constant 0 : index
    %21 = vector.load %arg1[%c0, %c0_4] : memref<32x16xf32, #tpu.memory_space<vmem>>, vector<32x16xf32>
    %22 = arith.truncf %21 : vector<32x16xf32> to vector<32x16xbf16>
    %c0_5 = arith.constant 0 : index
    %c0_6 = arith.constant 0 : index
    %c0_7 = arith.constant 0 : index
    %23 = vector.load %arg2[%c0_5, %c0_6, %c0_7] : memref<3x16x128xbf16, #tpu.memory_space<vmem>>, vector<1x16x128xbf16>
    %24 = vector.shape_cast %23 : vector<1x16x128xbf16> to vector<16x128xbf16>
    %c1 = arith.constant 1 : index
    %c0_8 = arith.constant 0 : index
    %c0_9 = arith.constant 0 : index
    %25 = vector.load %arg2[%c1, %c0_8, %c0_9] : memref<3x16x128xbf16, #tpu.memory_space<vmem>>, vector<1x16x128xbf16>
    %26 = vector.shape_cast %25 : vector<1x16x128xbf16> to vector<16x128xbf16>
    %c2 = arith.constant 2 : index
    %c0_10 = arith.constant 0 : index
    %c0_11 = arith.constant 0 : index
    %27 = vector.load %arg2[%c2, %c0_10, %c0_11] : memref<3x16x128xbf16, #tpu.memory_space<vmem>>, vector<1x16x128xbf16>
    %28 = vector.shape_cast %27 : vector<1x16x128xbf16> to vector<16x128xbf16>
    %c0_12 = arith.constant 0 : index
    %c0_13 = arith.constant 0 : index
    %29 = vector.load %arg3[%c0_12, %c0_13] : memref<1x128xf32, #tpu.memory_space<vmem>>, vector<1x128xf32>
    %cst = arith.constant dense<0.000000e+00> : vector<32x128xf32>
    %30 = tpu.matmul %22, %24, %cst {dimension_numbers = #tpu.dot_dimension_numbers<[1], [0], [0], [1], [0, 0, 1, 1], [], []>} : vector<32x16xbf16>, vector<16x128xbf16>, vector<32x128xf32> -> vector<32x128xf32>
    %cst_14 = arith.constant dense<0.000000e+00> : vector<32x128xf32>
    %31 = tpu.matmul %22, %26, %cst_14 {dimension_numbers = #tpu.dot_dimension_numbers<[1], [0], [0], [1], [0, 0, 1, 1], [], []>} : vector<32x16xbf16>, vector<16x128xbf16>, vector<32x128xf32> -> vector<32x128xf32>
    %cst_15 = arith.constant dense<0.000000e+00> : vector<32x128xf32>
    %32 = tpu.matmul %22, %28, %cst_15 {dimension_numbers = #tpu.dot_dimension_numbers<[1], [0], [0], [1], [0, 0, 1, 1], [], []>} : vector<32x16xbf16>, vector<16x128xbf16>, vector<32x128xf32> -> vector<32x128xf32>
    %33 = vector.broadcast %29 : vector<1x128xf32> to vector<32x128xf32>
    %34 = arith.addf %31, %33 : vector<32x128xf32>
    %c1_i32_16 = arith.constant 1 : i32
    %35 = tpu.dynamic_rotate %30 by %c1_i32_16 dim 0 : vector<32x128xf32>, i32 -> vector<32x128xf32>
    %cst_17 = arith.constant 0.000000e+00 : f32
    %36 = vector.broadcast %cst_17 : f32 to vector<32x128xf32>
    %37 = arith.select %18, %35, %36 : vector<32x128xi1>, vector<32x128xf32>
    %38 = arith.addf %34, %37 : vector<32x128xf32>
    %c31_i32 = arith.constant 31 : i32
    %39 = tpu.dynamic_rotate %32 by %c31_i32 dim 0 : vector<32x128xf32>, i32 -> vector<32x128xf32>
    %cst_18 = arith.constant 0.000000e+00 : f32
    %40 = vector.broadcast %cst_18 : f32 to vector<32x128xf32>
    %41 = arith.select %20, %39, %40 : vector<32x128xi1>, vector<32x128xf32>
    %42 = arith.addf %38, %41 : vector<32x128xf32>
    %cst_19 = arith.constant 0.000000e+00 : f32
    %43 = vector.broadcast %cst_19 : f32 to vector<32x128xf32>
    %44 = arith.maximumf %42, %43 : vector<32x128xf32>
    %45 = arith.truncf %44 : vector<32x128xf32> to vector<32x128xbf16>
    %c0_20 = arith.constant 0 : index
    %c0_21 = arith.constant 0 : index
    %c0_22 = arith.constant 0 : index
    %46 = vector.load %arg4[%c0_20, %c0_21, %c0_22] : memref<9x128x128xbf16, #tpu.memory_space<vmem>>, vector<1x128x128xbf16>
    %47 = vector.shape_cast %46 : vector<1x128x128xbf16> to vector<128x128xbf16>
    %c1_23 = arith.constant 1 : index
    %c0_24 = arith.constant 0 : index
    %c0_25 = arith.constant 0 : index
    %48 = vector.load %arg4[%c1_23, %c0_24, %c0_25] : memref<9x128x128xbf16, #tpu.memory_space<vmem>>, vector<1x128x128xbf16>
    %49 = vector.shape_cast %48 : vector<1x128x128xbf16> to vector<128x128xbf16>
    %c2_26 = arith.constant 2 : index
    %c0_27 = arith.constant 0 : index
    %c0_28 = arith.constant 0 : index
    %50 = vector.load %arg4[%c2_26, %c0_27, %c0_28] : memref<9x128x128xbf16, #tpu.memory_space<vmem>>, vector<1x128x128xbf16>
    %51 = vector.shape_cast %50 : vector<1x128x128xbf16> to vector<128x128xbf16>
    %c0_29 = arith.constant 0 : index
    %c0_30 = arith.constant 0 : index
    %c0_31 = arith.constant 0 : index
    %52 = vector.load %arg5[%c0_29, %c0_30, %c0_31] : memref<3x1x128xf32, #tpu.memory_space<vmem>>, vector<1x1x128xf32>
    %53 = vector.shape_cast %52 : vector<1x1x128xf32> to vector<1x128xf32>
    %cst_32 = arith.constant dense<0.000000e+00> : vector<32x128xf32>
    %54 = tpu.matmul %45, %47, %cst_32 {dimension_numbers = #tpu.dot_dimension_numbers<[1], [0], [0], [1], [0, 0, 1, 1], [], []>} : vector<32x128xbf16>, vector<128x128xbf16>, vector<32x128xf32> -> vector<32x128xf32>
    %cst_33 = arith.constant dense<0.000000e+00> : vector<32x128xf32>
    %55 = tpu.matmul %45, %49, %cst_33 {dimension_numbers = #tpu.dot_dimension_numbers<[1], [0], [0], [1], [0, 0, 1, 1], [], []>} : vector<32x128xbf16>, vector<128x128xbf16>, vector<32x128xf32> -> vector<32x128xf32>
    %cst_34 = arith.constant dense<0.000000e+00> : vector<32x128xf32>
    %56 = tpu.matmul %45, %51, %cst_34 {dimension_numbers = #tpu.dot_dimension_numbers<[1], [0], [0], [1], [0, 0, 1, 1], [], []>} : vector<32x128xbf16>, vector<128x128xbf16>, vector<32x128xf32> -> vector<32x128xf32>
    %57 = vector.broadcast %53 : vector<1x128xf32> to vector<32x128xf32>
    %58 = arith.addf %55, %57 : vector<32x128xf32>
    %c1_i32_35 = arith.constant 1 : i32
    %59 = tpu.dynamic_rotate %54 by %c1_i32_35 dim 0 : vector<32x128xf32>, i32 -> vector<32x128xf32>
    %cst_36 = arith.constant 0.000000e+00 : f32
    %60 = vector.broadcast %cst_36 : f32 to vector<32x128xf32>
    %61 = arith.select %18, %59, %60 : vector<32x128xi1>, vector<32x128xf32>
    %62 = arith.addf %58, %61 : vector<32x128xf32>
    %c31_i32_37 = arith.constant 31 : i32
    %63 = tpu.dynamic_rotate %56 by %c31_i32_37 dim 0 : vector<32x128xf32>, i32 -> vector<32x128xf32>
    %cst_38 = arith.constant 0.000000e+00 : f32
    %64 = vector.broadcast %cst_38 : f32 to vector<32x128xf32>
    %65 = arith.select %20, %63, %64 : vector<32x128xi1>, vector<32x128xf32>
    %66 = arith.addf %62, %65 : vector<32x128xf32>
    %cst_39 = arith.constant 0.000000e+00 : f32
    %67 = vector.broadcast %cst_39 : f32 to vector<32x128xf32>
    %68 = arith.maximumf %66, %67 : vector<32x128xf32>
    %69 = arith.truncf %68 : vector<32x128xf32> to vector<32x128xbf16>
    %c3 = arith.constant 3 : index
    %c0_40 = arith.constant 0 : index
    %c0_41 = arith.constant 0 : index
    %70 = vector.load %arg4[%c3, %c0_40, %c0_41] : memref<9x128x128xbf16, #tpu.memory_space<vmem>>, vector<1x128x128xbf16>
    %71 = vector.shape_cast %70 : vector<1x128x128xbf16> to vector<128x128xbf16>
    %c4 = arith.constant 4 : index
    %c0_42 = arith.constant 0 : index
    %c0_43 = arith.constant 0 : index
    %72 = vector.load %arg4[%c4, %c0_42, %c0_43] : memref<9x128x128xbf16, #tpu.memory_space<vmem>>, vector<1x128x128xbf16>
    %73 = vector.shape_cast %72 : vector<1x128x128xbf16> to vector<128x128xbf16>
    %c5 = arith.constant 5 : index
    %c0_44 = arith.constant 0 : index
    %c0_45 = arith.constant 0 : index
    %74 = vector.load %arg4[%c5, %c0_44, %c0_45] : memref<9x128x128xbf16, #tpu.memory_space<vmem>>, vector<1x128x128xbf16>
    %75 = vector.shape_cast %74 : vector<1x128x128xbf16> to vector<128x128xbf16>
    %c1_46 = arith.constant 1 : index
    %c0_47 = arith.constant 0 : index
    %c0_48 = arith.constant 0 : index
    %76 = vector.load %arg5[%c1_46, %c0_47, %c0_48] : memref<3x1x128xf32, #tpu.memory_space<vmem>>, vector<1x1x128xf32>
    %77 = vector.shape_cast %76 : vector<1x1x128xf32> to vector<1x128xf32>
    %cst_49 = arith.constant dense<0.000000e+00> : vector<32x128xf32>
    %78 = tpu.matmul %69, %71, %cst_49 {dimension_numbers = #tpu.dot_dimension_numbers<[1], [0], [0], [1], [0, 0, 1, 1], [], []>} : vector<32x128xbf16>, vector<128x128xbf16>, vector<32x128xf32> -> vector<32x128xf32>
    %cst_50 = arith.constant dense<0.000000e+00> : vector<32x128xf32>
    %79 = tpu.matmul %69, %73, %cst_50 {dimension_numbers = #tpu.dot_dimension_numbers<[1], [0], [0], [1], [0, 0, 1, 1], [], []>} : vector<32x128xbf16>, vector<128x128xbf16>, vector<32x128xf32> -> vector<32x128xf32>
    %cst_51 = arith.constant dense<0.000000e+00> : vector<32x128xf32>
    %80 = tpu.matmul %69, %75, %cst_51 {dimension_numbers = #tpu.dot_dimension_numbers<[1], [0], [0], [1], [0, 0, 1, 1], [], []>} : vector<32x128xbf16>, vector<128x128xbf16>, vector<32x128xf32> -> vector<32x128xf32>
    %81 = vector.broadcast %77 : vector<1x128xf32> to vector<32x128xf32>
    %82 = arith.addf %79, %81 : vector<32x128xf32>
    %c1_i32_52 = arith.constant 1 : i32
    %83 = tpu.dynamic_rotate %78 by %c1_i32_52 dim 0 : vector<32x128xf32>, i32 -> vector<32x128xf32>
    %cst_53 = arith.constant 0.000000e+00 : f32
    %84 = vector.broadcast %cst_53 : f32 to vector<32x128xf32>
    %85 = arith.select %18, %83, %84 : vector<32x128xi1>, vector<32x128xf32>
    %86 = arith.addf %82, %85 : vector<32x128xf32>
    %c31_i32_54 = arith.constant 31 : i32
    %87 = tpu.dynamic_rotate %80 by %c31_i32_54 dim 0 : vector<32x128xf32>, i32 -> vector<32x128xf32>
    %cst_55 = arith.constant 0.000000e+00 : f32
    %88 = vector.broadcast %cst_55 : f32 to vector<32x128xf32>
    %89 = arith.select %20, %87, %88 : vector<32x128xi1>, vector<32x128xf32>
    %90 = arith.addf %86, %89 : vector<32x128xf32>
    %cst_56 = arith.constant 0.000000e+00 : f32
    %91 = vector.broadcast %cst_56 : f32 to vector<32x128xf32>
    %92 = arith.maximumf %90, %91 : vector<32x128xf32>
    %93 = arith.truncf %92 : vector<32x128xf32> to vector<32x128xbf16>
    %c6 = arith.constant 6 : index
    %c0_57 = arith.constant 0 : index
    %c0_58 = arith.constant 0 : index
    %94 = vector.load %arg4[%c6, %c0_57, %c0_58] : memref<9x128x128xbf16, #tpu.memory_space<vmem>>, vector<1x128x128xbf16>
    %95 = vector.shape_cast %94 : vector<1x128x128xbf16> to vector<128x128xbf16>
    %c7 = arith.constant 7 : index
    %c0_59 = arith.constant 0 : index
    %c0_60 = arith.constant 0 : index
    %96 = vector.load %arg4[%c7, %c0_59, %c0_60] : memref<9x128x128xbf16, #tpu.memory_space<vmem>>, vector<1x128x128xbf16>
    %97 = vector.shape_cast %96 : vector<1x128x128xbf16> to vector<128x128xbf16>
    %c8 = arith.constant 8 : index
    %c0_61 = arith.constant 0 : index
    %c0_62 = arith.constant 0 : index
    %98 = vector.load %arg4[%c8, %c0_61, %c0_62] : memref<9x128x128xbf16, #tpu.memory_space<vmem>>, vector<1x128x128xbf16>
    %99 = vector.shape_cast %98 : vector<1x128x128xbf16> to vector<128x128xbf16>
    %c2_63 = arith.constant 2 : index
    %c0_64 = arith.constant 0 : index
    %c0_65 = arith.constant 0 : index
    %100 = vector.load %arg5[%c2_63, %c0_64, %c0_65] : memref<3x1x128xf32, #tpu.memory_space<vmem>>, vector<1x1x128xf32>
    %101 = vector.shape_cast %100 : vector<1x1x128xf32> to vector<1x128xf32>
    %cst_66 = arith.constant dense<0.000000e+00> : vector<32x128xf32>
    %102 = tpu.matmul %93, %95, %cst_66 {dimension_numbers = #tpu.dot_dimension_numbers<[1], [0], [0], [1], [0, 0, 1, 1], [], []>} : vector<32x128xbf16>, vector<128x128xbf16>, vector<32x128xf32> -> vector<32x128xf32>
    %cst_67 = arith.constant dense<0.000000e+00> : vector<32x128xf32>
    %103 = tpu.matmul %93, %97, %cst_67 {dimension_numbers = #tpu.dot_dimension_numbers<[1], [0], [0], [1], [0, 0, 1, 1], [], []>} : vector<32x128xbf16>, vector<128x128xbf16>, vector<32x128xf32> -> vector<32x128xf32>
    %cst_68 = arith.constant dense<0.000000e+00> : vector<32x128xf32>
    %104 = tpu.matmul %93, %99, %cst_68 {dimension_numbers = #tpu.dot_dimension_numbers<[1], [0], [0], [1], [0, 0, 1, 1], [], []>} : vector<32x128xbf16>, vector<128x128xbf16>, vector<32x128xf32> -> vector<32x128xf32>
    %105 = vector.broadcast %101 : vector<1x128xf32> to vector<32x128xf32>
    %106 = arith.addf %103, %105 : vector<32x128xf32>
    %c1_i32_69 = arith.constant 1 : i32
    %107 = tpu.dynamic_rotate %102 by %c1_i32_69 dim 0 : vector<32x128xf32>, i32 -> vector<32x128xf32>
    %cst_70 = arith.constant 0.000000e+00 : f32
    %108 = vector.broadcast %cst_70 : f32 to vector<32x128xf32>
    %109 = arith.select %18, %107, %108 : vector<32x128xi1>, vector<32x128xf32>
    %110 = arith.addf %106, %109 : vector<32x128xf32>
    %c31_i32_71 = arith.constant 31 : i32
    %111 = tpu.dynamic_rotate %104 by %c31_i32_71 dim 0 : vector<32x128xf32>, i32 -> vector<32x128xf32>
    %cst_72 = arith.constant 0.000000e+00 : f32
    %112 = vector.broadcast %cst_72 : f32 to vector<32x128xf32>
    %113 = arith.select %20, %111, %112 : vector<32x128xi1>, vector<32x128xf32>
    %114 = arith.addf %110, %113 : vector<32x128xf32>
    %cst_73 = arith.constant 0.000000e+00 : f32
    %115 = vector.broadcast %cst_73 : f32 to vector<32x128xf32>
    %116 = arith.maximumf %114, %115 : vector<32x128xf32>
    %117 = arith.truncf %116 : vector<32x128xf32> to vector<32x128xbf16>
    %118 = arith.extf %117 : vector<32x128xbf16> to vector<32x128xf32>
    %119 = vector.shape_cast %118 : vector<32x128xf32> to vector<2x16x128xf32>
    %cst_74 = arith.constant dense<0.000000e+00> : vector<2x128xf32>
    %120 = vector.multi_reduction <add>, %119, %cst_74 [1] : vector<2x16x128xf32> to vector<2x128xf32>
    %cst_75 = arith.constant 6.250000e-02 : f32
    %121 = vector.broadcast %cst_75 : f32 to vector<2x128xf32>
    %122 = arith.mulf %120, %121 : vector<2x128xf32>
    %123 = arith.truncf %122 : vector<2x128xf32> to vector<2x128xbf16>
    %c0_76 = arith.constant 0 : index
    %c0_77 = arith.constant 0 : index
    %124 = vector.load %arg6[%c0_76, %c0_77] : memref<128x64xbf16, #tpu.memory_space<vmem>>, vector<128x64xbf16>
    %cst_78 = arith.constant dense<0.000000e+00> : vector<2x64xf32>
    %125 = tpu.matmul %123, %124, %cst_78 {dimension_numbers = #tpu.dot_dimension_numbers<[1], [0], [0], [1], [0, 0, 1, 1], [], []>} : vector<2x128xbf16>, vector<128x64xbf16>, vector<2x64xf32> -> vector<2x64xf32>
    %c0_79 = arith.constant 0 : index
    %c0_80 = arith.constant 0 : index
    %126 = vector.load %arg7[%c0_79, %c0_80] : memref<1x64xf32, #tpu.memory_space<vmem>>, vector<1x64xf32>
    %127 = vector.broadcast %126 : vector<1x64xf32> to vector<2x64xf32>
    %128 = arith.addf %125, %127 : vector<2x64xf32>
    %cst_81 = arith.constant 0.000000e+00 : f32
    %129 = vector.broadcast %cst_81 : f32 to vector<2x64xf32>
    %130 = arith.maximumf %128, %129 : vector<2x64xf32>
    %131 = arith.truncf %130 : vector<2x64xf32> to vector<2x64xbf16>
    %c0_82 = arith.constant 0 : index
    %c0_83 = arith.constant 0 : index
    %132 = vector.load %arg8[%c0_82, %c0_83] : memref<64x128xbf16, #tpu.memory_space<vmem>>, vector<64x128xbf16>
    %cst_84 = arith.constant dense<0.000000e+00> : vector<2x128xf32>
    %133 = tpu.matmul %131, %132, %cst_84 {dimension_numbers = #tpu.dot_dimension_numbers<[1], [0], [0], [1], [0, 0, 1, 1], [], []>} : vector<2x64xbf16>, vector<64x128xbf16>, vector<2x128xf32> -> vector<2x128xf32>
    %c0_85 = arith.constant 0 : index
    %c0_86 = arith.constant 0 : index
    %134 = vector.load %arg9[%c0_85, %c0_86] : memref<1x128xf32, #tpu.memory_space<vmem>>, vector<1x128xf32>
    %135 = vector.broadcast %134 : vector<1x128xf32> to vector<2x128xf32>
    %136 = arith.addf %133, %135 : vector<2x128xf32>
    %c0_87 = arith.constant 0 : index
    %c0_88 = arith.constant 0 : index
    %137 = vector.load %arg10[%c0_87, %c0_88] : memref<2x128xf32, #tpu.memory_space<vmem>>, vector<2x128xf32>
    tpu.vector_store %arg10[%c0_87, %c0_88], %136 {strides = array<i32>} : memref<2x128xf32, #tpu.memory_space<vmem>>, vector<2x128xf32>,
    return
  }
  func.func @transform_0(%arg0: i32) -> (i32, i32) {
    %c0_i32 = arith.constant 0 : i32
    %c0_i32_0 = arith.constant 0 : i32
    return %arg0, %c0_i32 : i32, i32
  }
  func.func @transform_1(%arg0: i32) -> (i32, i32, i32) {
    %c0_i32 = arith.constant 0 : i32
    %c0_i32_0 = arith.constant 0 : i32
    %c0_i32_1 = arith.constant 0 : i32
    %c0_i32_2 = arith.constant 0 : i32
    return %c0_i32, %c0_i32_0, %c0_i32_1 : i32, i32, i32
  }
  func.func @transform_2(%arg0: i32) -> (i32, i32) {
    %c0_i32 = arith.constant 0 : i32
    %c0_i32_0 = arith.constant 0 : i32
    %c0_i32_1 = arith.constant 0 : i32
    return %c0_i32, %c0_i32_0 : i32, i32
  }
  func.func @transform_3(%arg0: i32) -> (i32, i32, i32) {
    %c0_i32 = arith.constant 0 : i32
    %c0_i32_0 = arith.constant 0 : i32
    %c0_i32_1 = arith.constant 0 : i32
    %c0_i32_2 = arith.constant 0 : i32
    return %c0_i32, %c0_i32_0, %c0_i32_1 : i32, i32, i32
  }
  func.func @transform_4(%arg0: i32) -> (i32, i32, i32) {
    %c0_i32 = arith.constant 0 : i32
    %c0_i32_0 = arith.constant 0 : i32
    %c0_i32_1 = arith.constant 0 : i32
    %c0_i32_2 = arith.constant 0 : i32
    return %c0_i32, %c0_i32_0, %c0_i32_1 : i32, i32, i32
  }
  func.func @transform_5(%arg0: i32) -> (i32, i32) {
    %c0_i32 = arith.constant 0 : i32
    %c0_i32_0 = arith.constant 0 : i32
    %c0_i32_1 = arith.constant 0 : i32
    return %c0_i32, %c0_i32_0 : i32, i32
  }
  func.func @transform_6(%arg0: i32) -> (i32, i32) {
    %c0_i32 = arith.constant 0 : i32
    %c0_i32_0 = arith.constant 0 : i32
    %c0_i32_1 = arith.constant 0 : i32
    return %c0_i32, %c0_i32_0 : i32, i32
  }
  func.func @transform_7(%arg0: i32) -> (i32, i32) {
    %c0_i32 = arith.constant 0 : i32
    %c0_i32_0 = arith.constant 0 : i32
    %c0_i32_1 = arith.constant 0 : i32
    return %c0_i32, %c0_i32_0 : i32, i32
  }
  func.func @transform_8(%arg0: i32) -> (i32, i32) {
    %c0_i32 = arith.constant 0 : i32
    %c0_i32_0 = arith.constant 0 : i32
    %c0_i32_1 = arith.constant 0 : i32
    return %c0_i32, %c0_i32_0 : i32, i32
  }
  func.func @transform_9(%arg0: i32) -> (i32, i32) {
    %c0_i32 = arith.constant 0 : i32
    %c0_i32_0 = arith.constant 0 : i32
    return %arg0, %c0_i32 : i32, i32
  }
}

</mosaic_0001>

<llo_original>
// kernel: model3_forward.1
$region0: #{model3_forward.1}
  #allocation0 [shape = 'u32[]', space=smem, size = 0x4, offset = 0x4, fixed_abs, tag = 'smem constant byte address 0x4 - core index']
  #allocation1 [shape = 'u32[144,128]{1,0:T(1,128)}', space=vmem, size = 0x12000, scoped, tag = 'internal scratch']
  %s0 = inlined_call_operand.vmem [shape: f32[32,16], index: 0, kind: input, shape index: {}]
  %s1 = inlined_call_operand.vmem [shape: bf16[3,16,128], index: 1, kind: input, shape index: {}]
  %s2 = inlined_call_operand.vmem [shape: f32[1,128], index: 2, kind: input, shape index: {}]
  %s3 = inlined_call_operand.hbm [shape: bf16[9,128,128], index: 3, kind: input, shape index: {}]
  %s4 = inlined_call_operand.vmem [shape: f32[3,1,128], index: 4, kind: input, shape index: {}]
  %s5 = inlined_call_operand.vmem [shape: bf16[128,64], index: 5, kind: input, shape index: {}]
  %s6 = inlined_call_operand.vmem [shape: f32[1,64], index: 6, kind: input, shape index: {}]
  %s7 = inlined_call_operand.vmem [shape: bf16[64,128], index: 7, kind: input, shape index: {}]
  %s8 = inlined_call_operand.vmem [shape: f32[1,128], index: 8, kind: input, shape index: {}]
  %s9 = inlined_call_operand.hbm [shape: f32[2,128], index: 9, kind: output, shape index: {}]
  %s10 = sld [smem:[#allocation0]]
  $region50: #{model3_forward.1} parent=0
    _
  %s12 = ssub.s32 1, %s10
  %s13 = scalar_select 0, %s12, %s10
  $region1: #{model3_forward.1} parent=0
    #allocation2 [shape = 'u8[294912]{0}', space=vmem, size = 0x48000, scoped, tag = 'input window, operand 3, single buffered']
    #allocation3 [shape = 's32[1]{0}', space=sflag, size = 0x4, scoped, tag = 'scoped memory for model3_forward.1']
    #allocation4 [shape = 's32[1]{0}', space=sflag, size = 0x4, scoped, tag = 'scoped memory for model3_forward.1']
    #allocation5 [shape = 'u8[1024]{0}', space=vmem, size = 0x400, scoped, tag = 'output window, operand 0, single buffered']
    %14 = vsyncpa [#allocation3], 0
    %15 = vsyncpa [#allocation4], 0
    // Predicated region
    $region2: #{model3_forward.1} parent=1 // pred_check
      _
    $region3: #{model3_forward.1} parent=1 // pred_check_branch
      %17 = sbr.rel (0) target = $region5
    $region4: #{model3_forward.1} parent=1 // pred_region
      _
    $region5: #{model3_forward.1} parent=1 // pred_fallthru
      _
    // Predicated region
    $region6: #{model3_forward.1} parent=1 // pred_check
      _
    $region7: #{model3_forward.1} parent=1 // pred_check_branch
      %19 = sbr.rel (0) target = $region9
    $region8: #{model3_forward.1} parent=1 // pred_region
      _
    $region9: #{model3_forward.1} parent=1 // pred_fallthru
      _
    // Predicated region
    $region10: #{model3_forward.1} parent=1 // pred_check
      _
    $region11: #{model3_forward.1} parent=1 // pred_check_branch
      %21 = sbr.rel (0) target = $region13
    $region12: #{model3_forward.1} parent=1 // pred_region
      _
    $region13: #{model3_forward.1} parent=1 // pred_fallthru
      _
    // Predicated region
    $region14: #{model3_forward.1} parent=1 // pred_check
      _
    $region15: #{model3_forward.1} parent=1 // pred_check_branch
      %23 = sbr.rel (0) target = $region17
    $region16: #{model3_forward.1} parent=1 // pred_region
      %s25 = ssub.s32 9216, 9216
      %26 = vsyncadd [#allocation3], %s25
      %s27 = sshll.u32 [#allocation2], 4
      %s28 = int_to_ptr.vmem [resolvable:$true] %s27
      %33 = dma.hbm_to_vmem [thread:$0]  %s3, 9216, %s28, [#allocation3], 64, 64, 4
    $region17: #{model3_forward.1} parent=1 // pred_fallthru
      _
    // Predicated region
    $region18: #{model3_forward.1} parent=1 // pred_check
      _
    $region19: #{model3_forward.1} parent=1 // pred_check_branch
      %35 = sbr.rel (0) target = $region21
    $region20: #{model3_forward.1} parent=1 // pred_region
      _
    $region21: #{model3_forward.1} parent=1 // pred_fallthru
      _
    // Predicated region
    $region22: #{model3_forward.1} parent=1 // pred_check
      _
    $region23: #{model3_forward.1} parent=1 // pred_check_branch
      %37 = sbr.rel (0) target = $region25
    $region24: #{model3_forward.1} parent=1 // pred_region
      _
    $region25: #{model3_forward.1} parent=1 // pred_fallthru
      _
    // Predicated region
    $region26: #{model3_forward.1} parent=1 // pred_check
      _
    $region27: #{model3_forward.1} parent=1 // pred_check_branch
      %39 = sbr.rel (0) target = $region29
    $region28: #{model3_forward.1} parent=1 // pred_region
      _
    $region29: #{model3_forward.1} parent=1 // pred_fallthru
      _
    // Predicated region
    $region30: #{model3_forward.1} parent=1 // pred_check
      _
    $region31: #{model3_forward.1} parent=1 // pred_check_branch
      %41 = sbr.rel (0) target = $region33
    $region32: #{model3_forward.1} parent=1 // pred_region
      _
    $region33: #{model3_forward.1} parent=1 // pred_fallthru
      _
    // Predicated region
    $region34: #{model3_forward.1} parent=1 // pred_check
      _
    $region35: #{model3_forward.1} parent=1 // pred_check_branch
      %43 = sbr.rel (0) target = $region37
    $region36: #{model3_forward.1} parent=1 // pred_region
      _
    $region37: #{model3_forward.1} parent=1 // pred_fallthru
      _
    // Predicated region
    $region38: #{model3_forward.1} parent=1 // pred_check
      _
    $region39: #{model3_forward.1} parent=1 // pred_check_branch
      %45 = sbr.rel (0) target = $region41
    $region40: #{model3_forward.1} parent=1 // pred_region
      %46 = dma.done [#allocation3], 9216
    $region41: #{model3_forward.1} parent=1 // pred_fallthru
      _
    %v48 = vlaneseq
    %v49 = vshrl.u32 %v48, 7
    %v50 = vadd.s32 %v49, 8
    %v51 = vadd.s32 %v49, 16
    %v52 = vadd.s32 %v49, 24
    %vm53 = vcmp.lt.s32.totalorder %v49, 0
    %v54 = vsub.s32 0, %v49
    %v55 = vsel %vm53, %v54, %v49
    %v56 = vshrl.u32 %v55, 4
    %v57 = vand.u32 %v55, 15
    %v58 = vsub.s32 0, %v57
    %v59 = vsel %vm53, %v58, %v57
    %vm60 = vcmp.lt.s32.totalorder %v50, 0
    %v61 = vsub.s32 0, %v50
    %v62 = vsel %vm60, %v61, %v50
    %v63 = vshrl.u32 %v62, 4
    %v64 = vand.u32 %v62, 15
    %v65 = vsub.s32 0, %v64
    %v66 = vsel %vm60, %v65, %v64
    %vm67 = vcmp.lt.s32.totalorder %v51, 0
    %v68 = vsub.s32 0, %v51
    %v69 = vsel %vm67, %v68, %v51
    %v70 = vshrl.u32 %v69, 4
    %v71 = vand.u32 %v69, 15
    %v72 = vsub.s32 0, %v71
    %v73 = vsel %vm67, %v72, %v71
    %vm74 = vcmp.lt.s32.totalorder %v52, 0
    %v75 = vsub.s32 0, %v52
    %v76 = vsel %vm74, %v75, %v52
    %v77 = vshrl.u32 %v76, 4
    %v78 = vand.u32 %v76, 15
    %v79 = vsub.s32 0, %v78
    %v80 = vsel %vm74, %v79, %v78
    %vm81 = vcmp.ne.s32.totalorder %v59, 0
    %vm82 = vcmp.ne.s32.totalorder %v66, 0
    %vm83 = vcmp.ne.s32.totalorder %v73, 0
    %vm84 = vcmp.ne.s32.totalorder %v80, 0
    %vm85 = vcmp.lt.s32.totalorder %v59, 0
    %vm86 = vcmp.lt.s32.totalorder %v66, 0
    %vm87 = vcmp.lt.s32.totalorder %v73, 0
    %vm88 = vcmp.lt.s32.totalorder %v80, 0
    %vm89 = vmand %vm85, %vm81
    %vm90 = vmand %vm86, %vm82
    %vm91 = vmand %vm87, %vm83
    %vm92 = vmand %vm88, %vm84
    %v93 = vadd.s32 %v59, 16
    %v94 = vadd.s32 %v66, 16
    %v95 = vadd.s32 %v73, 16
    %v96 = vadd.s32 %v80, 16
    %v97 = vsel %vm89, %v93, %v59
    %v98 = vsel %vm90, %v94, %v66
    %v99 = vsel %vm91, %v95, %v73
    %v100 = vsel %vm92, %v96, %v80
    %vm101 = vcmp.gt.s32.totalorder %v97, 0
    %vm102 = vcmp.gt.s32.totalorder %v98, 0
    %vm103 = vcmp.gt.s32.totalorder %v99, 0
    %vm104 = vcmp.gt.s32.totalorder %v100, 0
    %vm105 = vcmp.lt.s32.totalorder %v97, 15
    %vm106 = vcmp.lt.s32.totalorder %v98, 15
    %vm107 = vcmp.lt.s32.totalorder %v99, 15
    %vm108 = vcmp.lt.s32.totalorder %v100, 15
    %v109 = vld [vmem:[%s0] sm:$0xff]
    %v110 = vld [vmem:[%s0 + $0x8] sm:$0xff]
    %v111 = vld [vmem:[%s0 + $0x10] sm:$0xff]
    %v112 = vld [vmem:[%s0 + $0x18] sm:$0xff]
    %v113 = vpack.c.bf16 %v110, %v109
    %v114 = vpack.c.bf16 %v112, %v111
    %v115 = vld [vmem:[%s1] sm:$0xf]
    %v116 = vld [vmem:[%s1 + $0x4] sm:$0xf]
    %s117 = scalar_lea.vmem %s1, 8
    %v118 = vld [vmem:[%s117] sm:$0xf]
    %v119 = vld [vmem:[%s117 + $0x4] sm:$0xf]
    %s120 = scalar_lea.vmem %s1, 16
    %v121 = vld [vmem:[%s120] sm:$0xf]
    %v122 = vld [vmem:[%s120 + $0x4] sm:$0xf]
    %v123 = vld [vmem:[%s2] sm:$0x1]
    %v126 = vunpack.c.l.b16 %v115
    %v127 = vunpack.c.l.b16 %v116
    %v128 = vpack.c.b16 %v127, %v126
    %vm130 = vcmask 130048
    %v132 = vsel %vm130, %v113, 0
    %v135 = vsel %vm130, %v114, 0
    %137 = vmatprep.subr.bf16.mxu0 0
    %138 = vmatpush1.bf16.msra.mxu0 0
    %139 = vmatprep.subr.bf16.mxu0 0
    %140 = vmatpush1.bf16.msra.mxu0 0
    %141 = vmatprep.subr.bf16.mxu0 0
    %142 = vmatpush1.bf16.msra.mxu0 0
    %143 = vmatprep.subr.bf16.mxu0 0
    %144 = vmatpush1.bf16.msra.mxu0 0
    %145 = vmatprep.subr.bf16.mxu0 0
    %146 = vmatpush1.bf16.msra.mxu0 0
    %147 = vmatprep.subr.bf16.mxu0 0
    %148 = vmatpush1.bf16.msra.mxu0 0
    %149 = vmatprep.subr.bf16.mxu0 0
    %150 = vmatpush1.bf16.msra.mxu0 0
    %151 = vmatprep.subr.bf16.mxu0 0
    %152 = vmatpush1.bf16.msra.mxu0 %v128
    %153 = vmatprep.subr.bf16.mxu0 0
    %154 = vmatpush2.bf16.msra.mxu0 0
    %155 = vmatprep.subr.bf16.mxu0 0
    %156 = vmatpush2.bf16.msra.mxu0 0
    %157 = vmatprep.subr.bf16.mxu0 0
    %158 = vmatpush2.bf16.msra.mxu0 0
    %159 = vmatprep.subr.bf16.mxu0 0
    %160 = vmatpush2.bf16.msra.mxu0 0
    %161 = vmatprep.subr.bf16.mxu0 0
    %162 = vmatpush2.bf16.msra.mxu0 0
    %163 = vmatprep.subr.bf16.mxu0 0
    %164 = vmatpush2.bf16.msra.mxu0 0
    %165 = vmatprep.subr.bf16.mxu0 0
    %166 = vmatpush2.bf16.msra.mxu0 0
    %167 = vmatprep.subr.bf16.mxu0 0
    %168 = vmatpush2.bf16.msra.mxu0 0
    %169 = vmatprep.mubr.bf16.mxu0 0
    %170 = vmatmul.mubr.bf16.gmra.mxu0 %v132
    %v171 = vpop.f32.mrf.mxu0
    %v172 = vadd.f32 0.0, %v171
    %v173 = vpop.f32.mrf.mxu0
    %v174 = vpop.f32.mrf.mxu0
    %v175 = vadd.f32 0.0, %v174
    %v176 = vpop.f32.mrf.mxu0
    %177 = vmatprep.mubr.bf16.mxu0 0
    %178 = vmatmul.mubr.bf16.gmra.mxu0 %v135
    %v179 = vpop.f32.mrf.mxu0
    %v180 = vadd.f32 0.0, %v179
    %v181 = vpop.f32.mrf.mxu0
    %v182 = vpop.f32.mrf.mxu0
    %v183 = vadd.f32 0.0, %v182
    %v184 = vpop.f32.mrf.mxu0
    %185 = vdwg.mxu0
    %v188 = vunpack.c.l.b16 %v121
    %v189 = vunpack.c.l.b16 %v122
    %v190 = vpack.c.b16 %v189, %v188
    %192 = vmatprep.subr.bf16.mxu0 0
    %193 = vmatpush1.bf16.msra.mxu0 0
    %194 = vmatprep.subr.bf16.mxu0 0
    %195 = vmatpush1.bf16.msra.mxu0 0
    %196 = vmatprep.subr.bf16.mxu0 0
    %197 = vmatpush1.bf16.msra.mxu0 0
    %198 = vmatprep.subr.bf16.mxu0 0
    %199 = vmatpush1.bf16.msra.mxu0 0
    %200 = vmatprep.subr.bf16.mxu0 0
    %201 = vmatpush1.bf16.msra.mxu0 0
    %202 = vmatprep.subr.bf16.mxu0 0
    %203 = vmatpush1.bf16.msra.mxu0 0
    %204 = vmatprep.subr.bf16.mxu0 0
    %205 = vmatpush1.bf16.msra.mxu0 0
    %206 = vmatprep.subr.bf16.mxu0 0
    %207 = vmatpush1.bf16.msra.mxu0 %v190
    %208 = vmatprep.subr.bf16.mxu0 0
    %209 = vmatpush2.bf16.msra.mxu0 0
    %210 = vmatprep.subr.bf16.mxu0 0
    %211 = vmatpush2.bf16.msra.mxu0 0
    %212 = vmatprep.subr.bf16.mxu0 0
    %213 = vmatpush2.bf16.msra.mxu0 0
    %214 = vmatprep.subr.bf16.mxu0 0
    %215 = vmatpush2.bf16.msra.mxu0 0
    %216 = vmatprep.subr.bf16.mxu0 0
    %217 = vmatpush2.bf16.msra.mxu0 0
    %218 = vmatprep.subr.bf16.mxu0 0
    %219 = vmatpush2.bf16.msra.mxu0 0
    %220 = vmatprep.subr.bf16.mxu0 0
    %221 = vmatpush2.bf16.msra.mxu0 0
    %222 = vmatprep.subr.bf16.mxu0 0
    %223 = vmatpush2.bf16.msra.mxu0 0
    %224 = vmatprep.mubr.bf16.mxu0 0
    %225 = vmatmul.mubr.bf16.gmra.mxu0 %v132
    %v226 = vpop.f32.mrf.mxu0
    %v227 = vadd.f32 0.0, %v226
    %v228 = vpop.f32.mrf.mxu0
    %v229 = vpop.f32.mrf.mxu0
    %v230 = vadd.f32 0.0, %v229
    %v231 = vpop.f32.mrf.mxu0
    %232 = vmatprep.mubr.bf16.mxu0 0
    %233 = vmatmul.mubr.bf16.gmra.mxu0 %v135
    %v234 = vpop.f32.mrf.mxu0
    %v235 = vadd.f32 0.0, %v234
    %v236 = vpop.f32.mrf.mxu0
    %v237 = vpop.f32.mrf.mxu0
    %v238 = vadd.f32 0.0, %v237
    %v239 = vpop.f32.mrf.mxu0
    %240 = vdwg.mxu0
    %v242 = vlaneseq
    %v243 = vshrl.u32 %v242, 7
    %v244 = vsub.s32 0, %v243
    %v245 = vrot.slane %v123, %v244
    %v249 = vunpack.c.l.b16 %v118
    %v250 = vunpack.c.l.b16 %v119
    %v251 = vpack.c.b16 %v250, %v249
    %253 = vmatprep.subr.bf16.mxu0 0
    %254 = vmatpush1.bf16.msra.mxu0 0
    %255 = vmatprep.subr.bf16.mxu0 0
    %256 = vmatpush1.bf16.msra.mxu0 0
    %257 = vmatprep.subr.bf16.mxu0 0
    %258 = vmatpush1.bf16.msra.mxu0 0
    %259 = vmatprep.subr.bf16.mxu0 0
    %260 = vmatpush1.bf16.msra.mxu0 0
    %261 = vmatprep.subr.bf16.mxu0 0
    %262 = vmatpush1.bf16.msra.mxu0 0
    %263 = vmatprep.subr.bf16.mxu0 0
    %264 = vmatpush1.bf16.msra.mxu0 0
    %265 = vmatprep.subr.bf16.mxu0 0
    %266 = vmatpush1.bf16.msra.mxu0 0
    %267 = vmatprep.subr.bf16.mxu0 0
    %268 = vmatpush1.bf16.msra.mxu0 %v251
    %269 = vmatprep.subr.bf16.mxu0 0
    %270 = vmatpush2.bf16.msra.mxu0 0
    %271 = vmatprep.subr.bf16.mxu0 0
    %272 = vmatpush2.bf16.msra.mxu0 0
    %273 = vmatprep.subr.bf16.mxu0 0
    %274 = vmatpush2.bf16.msra.mxu0 0
    %275 = vmatprep.subr.bf16.mxu0 0
    %276 = vmatpush2.bf16.msra.mxu0 0
    %277 = vmatprep.subr.bf16.mxu0 0
    %278 = vmatpush2.bf16.msra.mxu0 0
    %279 = vmatprep.subr.bf16.mxu0 0
    %280 = vmatpush2.bf16.msra.mxu0 0
    %281 = vmatprep.subr.bf16.mxu0 0
    %282 = vmatpush2.bf16.msra.mxu0 0
    %283 = vmatprep.subr.bf16.mxu0 0
    %284 = vmatpush2.bf16.msra.mxu0 0
    %285 = vmatprep.mubr.bf16.mxu0 0
    %286 = vmatmul.mubr.bf16.gmra.mxu0 %v132
    %v287 = vpop.f32.mrf.mxu0
    %v288 = vadd.f32 %v245, %v287
    %v289 = vpop.f32.mrf.mxu0
    %v290 = vpop.f32.mrf.mxu0
    %v291 = vadd.f32 %v245, %v290
    %v292 = vpop.f32.mrf.mxu0
    %293 = vmatprep.mubr.bf16.mxu0 0
    %294 = vmatmul.mubr.bf16.gmra.mxu0 %v135
    %v295 = vpop.f32.mrf.mxu0
    %v296 = vadd.f32 %v245, %v295
    %v297 = vpop.f32.mrf.mxu0
    %v298 = vpop.f32.mrf.mxu0
    %v299 = vadd.f32 %v245, %v298
    %v300 = vpop.f32.mrf.mxu0
    %301 = vdwg.mxu0
    %v302 = vrot.slane %v172, 7
    %v303 = vrot.slane %v175, 7
    %v304 = vrot.slane %v180, 7
    %v305 = vrot.slane %v183, 7
    %vm306 = vcmp.lt.s32.totalorder %v49, 1
    %v307 = vsel %vm306, %v304, %v305
    %v308 = vsel %vm306, %v303, %v304
    %v309 = vsel %vm306, %v302, %v303
    %v310 = vsel %vm306, %v305, %v302
    %v311 = vsel %vm101, %v310, 0.0
    %v312 = vsel %vm102, %v309, 0.0
    %v313 = vsel %vm103, %v308, 0.0
    %v314 = vsel %vm104, %v307, 0.0
    %v315 = vadd.f32 %v288, %v311
    %v316 = vadd.f32 %v291, %v312
    %v317 = vadd.f32 %v296, %v313
    %v318 = vadd.f32 %v299, %v314
    %v319 = vrot.slane %v227, 1
    %v320 = vrot.slane %v230, 1
    %v321 = vrot.slane %v235, 1
    %v322 = vrot.slane %v238, 1
    %vm323 = vcmp.lt.s32.totalorder %v49, 7
    %v324 = vsel %vm323, %v321, %v322
    %v325 = vsel %vm323, %v320, %v321
    %v326 = vsel %vm323, %v319, %v320
    %v327 = vsel %vm323, %v322, %v319
    %v328 = vsel %vm105, %v326, 0.0
    %v329 = vsel %vm106, %v325, 0.0
    %v330 = vsel %vm107, %v324, 0.0
    %v331 = vsel %vm108, %v327, 0.0
    %v332 = vadd.f32 %v315, %v328
    %v333 = vadd.f32 %v316, %v329
    %v334 = vadd.f32 %v317, %v330
    %v335 = vadd.f32 %v318, %v331
    %v336 = vmax.f32 %v332, 0.0
    %v337 = vmax.f32 %v333, 0.0
    %v338 = vmax.f32 %v334, 0.0
    %v339 = vmax.f32 %v335, 0.0
    %v340 = vpack.c.bf16 %v337, %v336
    %v341 = vpack.c.bf16 %v339, %v338
    %v342 = vld [vmem:[#allocation2] sm:$0xf]
    %v343 = vld [vmem:[#allocation2 + $0x4] sm:$0xf]
    %v344 = vld [vmem:[#allocation2 + $0x8] sm:$0xf]
    %v345 = vld [vmem:[#allocation2 + $0xc] sm:$0xf]
    %v346 = vld [vmem:[#allocation2 + $0x10] sm:$0xf]
    %v347 = vld [vmem:[#allocation2 + $0x14] sm:$0xf]
    %v348 = vld [vmem:[#allocation2 + $0x18] sm:$0xf]
    %v349 = vld [vmem:[#allocation2 + $0x1c] sm:$0xf]
    %v350 = vld [vmem:[#allocation2 + $0x20] sm:$0xf]
    %v351 = vld [vmem:[#allocation2 + $0x24] sm:$0xf]
    %v352 = vld [vmem:[#allocation2 + $0x28] sm:$0xf]
    %v353 = vld [vmem:[#allocation2 + $0x2c] sm:$0xf]
    %v354 = vld [vmem:[#allocation2 + $0x30] sm:$0xf]
    %v355 = vld [vmem:[#allocation2 + $0x34] sm:$0xf]
    %v356 = vld [vmem:[#allocation2 + $0x38] sm:$0xf]
    %v357 = vld [vmem:[#allocation2 + $0x3c] sm:$0xf]
    %s358 = scalar_lea.vmem [#allocation2], 64
    %v359 = vld [vmem:[%s358] sm:$0xf]
    %v360 = vld [vmem:[%s358 + $0x4] sm:$0xf]
    %v361 = vld [vmem:[%s358 + $0x8] sm:$0xf]
    %v362 = vld [vmem:[%s358 + $0xc] sm:$0xf]
    %v363 = vld [vmem:[%s358 + $0x10] sm:$0xf]
    %v364 = vld [vmem:[%s358 + $0x14] sm:$0xf]
    %v365 = vld [vmem:[%s358 + $0x18] sm:$0xf]
    %v366 = vld [vmem:[%s358 + $0x1c] sm:$0xf]
    %v367 = vld [vmem:[%s358 + $0x20] sm:$0xf]
    %v368 = vld [vmem:[%s358 + $0x24] sm:$0xf]
    %v369 = vld [vmem:[%s358 + $0x28] sm:$0xf]
    %v370 = vld [vmem:[%s358 + $0x2c] sm:$0xf]
    %v371 = vld [vmem:[%s358 + $0x30] sm:$0xf]
    %v372 = vld [vmem:[%s358 + $0x34] sm:$0xf]
    %v373 = vld [vmem:[%s358 + $0x38] sm:$0xf]
    %v374 = vld [vmem:[%s358 + $0x3c] sm:$0xf]
    %s375 = scalar_lea.vmem [#allocation2], 128
    %v376 = vld [vmem:[%s375] sm:$0xf]
    %v377 = vld [vmem:[%s375 + $0x4] sm:$0xf]
    %v378 = vld [vmem:[%s375 + $0x8] sm:$0xf]
    %v379 = vld [vmem:[%s375 + $0xc] sm:$0xf]
    %v380 = vld [vmem:[%s375 + $0x10] sm:$0xf]
    %v381 = vld [vmem:[%s375 + $0x14] sm:$0xf]
    %v382 = vld [vmem:[%s375 + $0x18] sm:$0xf]
    %v383 = vld [vmem:[%s375 + $0x1c] sm:$0xf]
    %v384 = vld [vmem:[%s375 + $0x20] sm:$0xf]
    %v385 = vld [vmem:[%s375 + $0x24] sm:$0xf]
    %v386 = vld [vmem:[%s375 + $0x28] sm:$0xf]
    %v387 = vld [vmem:[%s375 + $0x2c] sm:$0xf]
    %v388 = vld [vmem:[%s375 + $0x30] sm:$0xf]
    %v389 = vld [vmem:[%s375 + $0x34] sm:$0xf]
    %v390 = vld [vmem:[%s375 + $0x38] sm:$0xf]
    %v391 = vld [vmem:[%s375 + $0x3c] sm:$0xf]
    %v392 = vld [vmem:[%s4] sm:$0x1]
    %v409 = vunpack.c.l.b16 %v342
    %v410 = vunpack.c.l.b16 %v343
    %v411 = vunpack.c.l.b16 %v344
    %v412 = vunpack.c.l.b16 %v345
    %v413 = vunpack.c.l.b16 %v346
    %v414 = vunpack.c.l.b16 %v347
    %v415 = vunpack.c.l.b16 %v348
    %v416 = vunpack.c.l.b16 %v349
    %v417 = vunpack.c.l.b16 %v350
    %v418 = vunpack.c.l.b16 %v351
    %v419 = vunpack.c.l.b16 %v352
    %v420 = vunpack.c.l.b16 %v353
    %v421 = vunpack.c.l.b16 %v354
    %v422 = vunpack.c.l.b16 %v355
    %v423 = vunpack.c.l.b16 %v356
    %v424 = vunpack.c.l.b16 %v357
    %v425 = vpack.c.b16 %v410, %v409
    %v426 = vpack.c.b16 %v412, %v411
    %v427 = vpack.c.b16 %v414, %v413
    %v428 = vpack.c.b16 %v416, %v415
    %v429 = vpack.c.b16 %v418, %v417
    %v430 = vpack.c.b16 %v420, %v419
    %v431 = vpack.c.b16 %v422, %v421
    %v432 = vpack.c.b16 %v424, %v423
    %441 = vmatprep.subr.bf16.mxu0 0
    %442 = vmatpush1.bf16.msra.mxu0 %v432
    %443 = vmatprep.subr.bf16.mxu0 0
    %444 = vmatpush1.bf16.msra.mxu0 %v431
    %445 = vmatprep.subr.bf16.mxu0 0
    %446 = vmatpush1.bf16.msra.mxu0 %v430
    %447 = vmatprep.subr.bf16.mxu0 0
    %448 = vmatpush1.bf16.msra.mxu0 %v429
    %449 = vmatprep.subr.bf16.mxu0 0
    %450 = vmatpush1.bf16.msra.mxu0 %v428
    %451 = vmatprep.subr.bf16.mxu0 0
    %452 = vmatpush1.bf16.msra.mxu0 %v427
    %453 = vmatprep.subr.bf16.mxu0 0
    %454 = vmatpush1.bf16.msra.mxu0 %v426
    %455 = vmatprep.subr.bf16.mxu0 0
    %456 = vmatpush1.bf16.msra.mxu0 %v425
    %457 = vmatprep.subr.bf16.mxu0 0
    %458 = vmatpush2.bf16.msra.mxu0 0
    %459 = vmatprep.subr.bf16.mxu0 0
    %460 = vmatpush2.bf16.msra.mxu0 0
    %461 = vmatprep.subr.bf16.mxu0 0
    %462 = vmatpush2.bf16.msra.mxu0 0
    %463 = vmatprep.subr.bf16.mxu0 0
    %464 = vmatpush2.bf16.msra.mxu0 0
    %465 = vmatprep.subr.bf16.mxu0 0
    %466 = vmatpush2.bf16.msra.mxu0 0
    %467 = vmatprep.subr.bf16.mxu0 0
    %468 = vmatpush2.bf16.msra.mxu0 0
    %469 = vmatprep.subr.bf16.mxu0 0
    %470 = vmatpush2.bf16.msra.mxu0 0
    %471 = vmatprep.subr.bf16.mxu0 0
    %472 = vmatpush2.bf16.msra.mxu0 0
    %473 = vmatprep.mubr.bf16.mxu0 0
    %474 = vmatmul.mubr.bf16.gmra.mxu0 %v340
    %v475 = vpop.f32.mrf.mxu0
    %v476 = vadd.f32 0.0, %v475
    %v477 = vpop.f32.mrf.mxu0
    %v478 = vpop.f32.mrf.mxu0
    %v479 = vadd.f32 0.0, %v478
    %v480 = vpop.f32.mrf.mxu0
    %481 = vmatprep.mubr.bf16.mxu0 0
    %482 = vmatmul.mubr.bf16.gmra.mxu0 %v341
    %v483 = vpop.f32.mrf.mxu0
    %v484 = vadd.f32 0.0, %v483
    %v485 = vpop.f32.mrf.mxu0
    %v486 = vpop.f32.mrf.mxu0
    %v487 = vadd.f32 0.0, %v486
    %v488 = vpop.f32.mrf.mxu0
    %489 = vdwg.mxu0
    %v506 = vunpack.c.l.b16 %v376
    %v507 = vunpack.c.l.b16 %v377
    %v508 = vunpack.c.l.b16 %v378
    %v509 = vunpack.c.l.b16 %v379
    %v510 = vunpack.c.l.b16 %v380
    %v511 = vunpack.c.l.b16 %v381
    %v512 = vunpack.c.l.b16 %v382
    %v513 = vunpack.c.l.b16 %v383
    %v514 = vunpack.c.l.b16 %v384
    %v515 = vunpack.c.l.b16 %v385
    %v516 = vunpack.c.l.b16 %v386
    %v517 = vunpack.c.l.b16 %v387
    %v518 = vunpack.c.l.b16 %v388
    %v519 = vunpack.c.l.b16 %v389
    %v520 = vunpack.c.l.b16 %v390
    %v521 = vunpack.c.l.b16 %v391
    %v522 = vpack.c.b16 %v507, %v506
    %v523 = vpack.c.b16 %v509, %v508
    %v524 = vpack.c.b16 %v511, %v510
    %v525 = vpack.c.b16 %v513, %v512
    %v526 = vpack.c.b16 %v515, %v514
    %v527 = vpack.c.b16 %v517, %v516
    %v528 = vpack.c.b16 %v519, %v518
    %v529 = vpack.c.b16 %v521, %v520
    %538 = vmatprep.subr.bf16.mxu0 0
    %539 = vmatpush1.bf16.msra.mxu0 %v529
    %540 = vmatprep.subr.bf16.mxu0 0
    %541 = vmatpush1.bf16.msra.mxu0 %v528
    %542 = vmatprep.subr.bf16.mxu0 0
    %543 = vmatpush1.bf16.msra.mxu0 %v527
    %544 = vmatprep.subr.bf16.mxu0 0
    %545 = vmatpush1.bf16.msra.mxu0 %v526
    %546 = vmatprep.subr.bf16.mxu0 0
    %547 = vmatpush1.bf16.msra.mxu0 %v525
    %548 = vmatprep.subr.bf16.mxu0 0
    %549 = vmatpush1.bf16.msra.mxu0 %v524
    %550 = vmatprep.subr.bf16.mxu0 0
    %551 = vmatpush1.bf16.msra.mxu0 %v523
    %552 = vmatprep.subr.bf16.mxu0 0
    %553 = vmatpush1.bf16.msra.mxu0 %v522
    %554 = vmatprep.subr.bf16.mxu0 0
    %555 = vmatpush2.bf16.msra.mxu0 0
    %556 = vmatprep.subr.bf16.mxu0 0
    %557 = vmatpush2.bf16.msra.mxu0 0
    %558 = vmatprep.subr.bf16.mxu0 0
    %559 = vmatpush2.bf16.msra.mxu0 0
    %560 = vmatprep.subr.bf16.mxu0 0
    %561 = vmatpush2.bf16.msra.mxu0 0
    %562 = vmatprep.subr.bf16.mxu0 0
    %563 = vmatpush2.bf16.msra.mxu0 0
    %564 = vmatprep.subr.bf16.mxu0 0
    %565 = vmatpush2.bf16.msra.mxu0 0
    %566 = vmatprep.subr.bf16.mxu0 0
    %567 = vmatpush2.bf16.msra.mxu0 0
    %568 = vmatprep.subr.bf16.mxu0 0
    %569 = vmatpush2.bf16.msra.mxu0 0
    %570 = vmatprep.mubr.bf16.mxu0 0
    %571 = vmatmul.mubr.bf16.gmra.mxu0 %v340
    %v572 = vpop.f32.mrf.mxu0
    %v573 = vadd.f32 0.0, %v572
    %v574 = vpop.f32.mrf.mxu0
    %v575 = vpop.f32.mrf.mxu0
    %v576 = vadd.f32 0.0, %v575
    %v577 = vpop.f32.mrf.mxu0
    %578 = vmatprep.mubr.bf16.mxu0 0
    %579 = vmatmul.mubr.bf16.gmra.mxu0 %v341
    %v580 = vpop.f32.mrf.mxu0
    %v581 = vadd.f32 0.0, %v580
    %v582 = vpop.f32.mrf.mxu0
    %v583 = vpop.f32.mrf.mxu0
    %v584 = vadd.f32 0.0, %v583
    %v585 = vpop.f32.mrf.mxu0
    %586 = vdwg.mxu0
    %v588 = vlaneseq
    %v589 = vshrl.u32 %v588, 7
    %v590 = vsub.s32 0, %v589
    %v591 = vrot.slane %v392, %v590
    %v609 = vunpack.c.l.b16 %v359
    %v610 = vunpack.c.l.b16 %v360
    %v611 = vunpack.c.l.b16 %v361
    %v612 = vunpack.c.l.b16 %v362
    %v613 = vunpack.c.l.b16 %v363
    %v614 = vunpack.c.l.b16 %v364
    %v615 = vunpack.c.l.b16 %v365
    %v616 = vunpack.c.l.b16 %v366
    %v617 = vunpack.c.l.b16 %v367
    %v618 = vunpack.c.l.b16 %v368
    %v619 = vunpack.c.l.b16 %v369
    %v620 = vunpack.c.l.b16 %v370
    %v621 = vunpack.c.l.b16 %v371
    %v622 = vunpack.c.l.b16 %v372
    %v623 = vunpack.c.l.b16 %v373
    %v624 = vunpack.c.l.b16 %v374
    %v625 = vpack.c.b16 %v610, %v609
    %v626 = vpack.c.b16 %v612, %v611
    %v627 = vpack.c.b16 %v614, %v613
    %v628 = vpack.c.b16 %v616, %v615
    %v629 = vpack.c.b16 %v618, %v617
    %v630 = vpack.c.b16 %v620, %v619
    %v631 = vpack.c.b16 %v622, %v621
    %v632 = vpack.c.b16 %v624, %v623
    %641 = vmatprep.subr.bf16.mxu0 0
    %642 = vmatpush1.bf16.msra.mxu0 %v632
    %643 = vmatprep.subr.bf16.mxu0 0
    %644 = vmatpush1.bf16.msra.mxu0 %v631
    %645 = vmatprep.subr.bf16.mxu0 0
    %646 = vmatpush1.bf16.msra.mxu0 %v630
    %647 = vmatprep.subr.bf16.mxu0 0
    %648 = vmatpush1.bf16.msra.mxu0 %v629
    %649 = vmatprep.subr.bf16.mxu0 0
    %650 = vmatpush1.bf16.msra.mxu0 %v628
    %651 = vmatprep.subr.bf16.mxu0 0
    %652 = vmatpush1.bf16.msra.mxu0 %v627
    %653 = vmatprep.subr.bf16.mxu0 0
    %654 = vmatpush1.bf16.msra.mxu0 %v626
    %655 = vmatprep.subr.bf16.mxu0 0
    %656 = vmatpush1.bf16.msra.mxu0 %v625
    %657 = vmatprep.subr.bf16.mxu0 0
    %658 = vmatpush2.bf16.msra.mxu0 0
    %659 = vmatprep.subr.bf16.mxu0 0
    %660 = vmatpush2.bf16.msra.mxu0 0
    %661 = vmatprep.subr.bf16.mxu0 0
    %662 = vmatpush2.bf16.msra.mxu0 0
    %663 = vmatprep.subr.bf16.mxu0 0
    %664 = vmatpush2.bf16.msra.mxu0 0
    %665 = vmatprep.subr.bf16.mxu0 0
    %666 = vmatpush2.bf16.msra.mxu0 0
    %667 = vmatprep.subr.bf16.mxu0 0
    %668 = vmatpush2.bf16.msra.mxu0 0
    %669 = vmatprep.subr.bf16.mxu0 0
    %670 = vmatpush2.bf16.msra.mxu0 0
    %671 = vmatprep.subr.bf16.mxu0 0
    %672 = vmatpush2.bf16.msra.mxu0 0
    %673 = vmatprep.mubr.bf16.mxu0 0
    %674 = vmatmul.mubr.bf16.gmra.mxu0 %v340
    %v675 = vpop.f32.mrf.mxu0
    %v676 = vadd.f32 %v591, %v675
    %v677 = vpop.f32.mrf.mxu0
    %v678 = vpop.f32.mrf.mxu0
    %v679 = vadd.f32 %v591, %v678
    %v680 = vpop.f32.mrf.mxu0
    %681 = vmatprep.mubr.bf16.mxu0 0
    %682 = vmatmul.mubr.bf16.gmra.mxu0 %v341
    %v683 = vpop.f32.mrf.mxu0
    %v684 = vadd.f32 %v591, %v683
    %v685 = vpop.f32.mrf.mxu0
    %v686 = vpop.f32.mrf.mxu0
    %v687 = vadd.f32 %v591, %v686
    %v688 = vpop.f32.mrf.mxu0
    %689 = vdwg.mxu0
    %v690 = vrot.slane %v476, 7
    %v691 = vrot.slane %v479, 7
    %v692 = vrot.slane %v484, 7
    %v693 = vrot.slane %v487, 7
    %v694 = vsel %vm306, %v692, %v693
    %v695 = vsel %vm306, %v691, %v692
    %v696 = vsel %vm306, %v690, %v691
    %v697 = vsel %vm306, %v693, %v690
    %v698 = vsel %vm101, %v697, 0.0
    %v699 = vsel %vm102, %v696, 0.0
    %v700 = vsel %vm103, %v695, 0.0
    %v701 = vsel %vm104, %v694, 0.0
    %v702 = vadd.f32 %v676, %v698
    %v703 = vadd.f32 %v679, %v699
    %v704 = vadd.f32 %v684, %v700
    %v705 = vadd.f32 %v687, %v701
    %v706 = vrot.slane %v573, 1
    %v707 = vrot.slane %v576, 1
    %v708 = vrot.slane %v581, 1
    %v709 = vrot.slane %v584, 1
    %v710 = vsel %vm323, %v708, %v709
    %v711 = vsel %vm323, %v707, %v708
    %v712 = vsel %vm323, %v706, %v707
    %v713 = vsel %vm323, %v709, %v706
    %v714 = vsel %vm105, %v712, 0.0
    %v715 = vsel %vm106, %v711, 0.0
    %v716 = vsel %vm107, %v710, 0.0
    %v717 = vsel %vm108, %v713, 0.0
    %v718 = vadd.f32 %v702, %v714
    %v719 = vadd.f32 %v703, %v715
    %v720 = vadd.f32 %v704, %v716
    %v721 = vadd.f32 %v705, %v717
    %v722 = vmax.f32 %v718, 0.0
    %v723 = vmax.f32 %v719, 0.0
    %v724 = vmax.f32 %v720, 0.0
    %v725 = vmax.f32 %v721, 0.0
    %v726 = vpack.c.bf16 %v723, %v722
    %v727 = vpack.c.bf16 %v725, %v724
    %s728 = scalar_lea.vmem [#allocation2], 192
    %v729 = vld [vmem:[%s728] sm:$0xf]
    %v730 = vld [vmem:[%s728 + $0x4] sm:$0xf]
    %v731 = vld [vmem:[%s728 + $0x8] sm:$0xf]
    %v732 = vld [vmem:[%s728 + $0xc] sm:$0xf]
    %v733 = vld [vmem:[%s728 + $0x10] sm:$0xf]
    %v734 = vld [vmem:[%s728 + $0x14] sm:$0xf]
    %v735 = vld [vmem:[%s728 + $0x18] sm:$0xf]
    %v736 = vld [vmem:[%s728 + $0x1c] sm:$0xf]
    %v737 = vld [vmem:[%s728 + $0x20] sm:$0xf]
    %v738 = vld [vmem:[%s728 + $0x24] sm:$0xf]
    %v739 = vld [vmem:[%s728 + $0x28] sm:$0xf]
    %v740 = vld [vmem:[%s728 + $0x2c] sm:$0xf]
    %v741 = vld [vmem:[%s728 + $0x30] sm:$0xf]
    %v742 = vld [vmem:[%s728 + $0x34] sm:$0xf]
    %v743 = vld [vmem:[%s728 + $0x38] sm:$0xf]
    %v744 = vld [vmem:[%s728 + $0x3c] sm:$0xf]
    %s745 = scalar_lea.vmem [#allocation2], 256
    %v746 = vld [vmem:[%s745] sm:$0xf]
    %v747 = vld [vmem:[%s745 + $0x4] sm:$0xf]
    %v748 = vld [vmem:[%s745 + $0x8] sm:$0xf]
    %v749 = vld [vmem:[%s745 + $0xc] sm:$0xf]
    %v750 = vld [vmem:[%s745 + $0x10] sm:$0xf]
    %v751 = vld [vmem:[%s745 + $0x14] sm:$0xf]
    %v752 = vld [vmem:[%s745 + $0x18] sm:$0xf]
    %v753 = vld [vmem:[%s745 + $0x1c] sm:$0xf]
    %v754 = vld [vmem:[%s745 + $0x20] sm:$0xf]
    %v755 = vld [vmem:[%s745 + $0x24] sm:$0xf]
    %v756 = vld [vmem:[%s745 + $0x28] sm:$0xf]
    %v757 = vld [vmem:[%s745 + $0x2c] sm:$0xf]
    %v758 = vld [vmem:[%s745 + $0x30] sm:$0xf]
    %v759 = vld [vmem:[%s745 + $0x34] sm:$0xf]
    %v760 = vld [vmem:[%s745 + $0x38] sm:$0xf]
    %v761 = vld [vmem:[%s745 + $0x3c] sm:$0xf]
    %s762 = scalar_lea.vmem [#allocation2], 320
    %v763 = vld [vmem:[%s762] sm:$0xf]
    %v764 = vld [vmem:[%s762 + $0x4] sm:$0xf]
    %v765 = vld [vmem:[%s762 + $0x8] sm:$0xf]
    %v766 = vld [vmem:[%s762 + $0xc] sm:$0xf]
    %v767 = vld [vmem:[%s762 + $0x10] sm:$0xf]
    %v768 = vld [vmem:[%s762 + $0x14] sm:$0xf]
    %v769 = vld [vmem:[%s762 + $0x18] sm:$0xf]
    %v770 = vld [vmem:[%s762 + $0x1c] sm:$0xf]
    %v771 = vld [vmem:[%s762 + $0x20] sm:$0xf]
    %v772 = vld [vmem:[%s762 + $0x24] sm:$0xf]
    %v773 = vld [vmem:[%s762 + $0x28] sm:$0xf]
    %v774 = vld [vmem:[%s762 + $0x2c] sm:$0xf]
    %v775 = vld [vmem:[%s762 + $0x30] sm:$0xf]
    %v776 = vld [vmem:[%s762 + $0x34] sm:$0xf]
    %v777 = vld [vmem:[%s762 + $0x38] sm:$0xf]
    %v778 = vld [vmem:[%s762 + $0x3c] sm:$0xf]
    %s779 = scalar_lea.vmem %s4, 1
    %v780 = vld [vmem:[%s779] sm:$0x1]
    %v797 = vunpack.c.l.b16 %v729
    %v798 = vunpack.c.l.b16 %v730
    %v799 = vunpack.c.l.b16 %v731
    %v800 = vunpack.c.l.b16 %v732
    %v801 = vunpack.c.l.b16 %v733
    %v802 = vunpack.c.l.b16 %v734
    %v803 = vunpack.c.l.b16 %v735
    %v804 = vunpack.c.l.b16 %v736
    %v805 = vunpack.c.l.b16 %v737
    %v806 = vunpack.c.l.b16 %v738
    %v807 = vunpack.c.l.b16 %v739
    %v808 = vunpack.c.l.b16 %v740
    %v809 = vunpack.c.l.b16 %v741
    %v810 = vunpack.c.l.b16 %v742
    %v811 = vunpack.c.l.b16 %v743
    %v812 = vunpack.c.l.b16 %v744
    %v813 = vpack.c.b16 %v798, %v797
    %v814 = vpack.c.b16 %v800, %v799
    %v815 = vpack.c.b16 %v802, %v801
    %v816 = vpack.c.b16 %v804, %v803
    %v817 = vpack.c.b16 %v806, %v805
    %v818 = vpack.c.b16 %v808, %v807
    %v819 = vpack.c.b16 %v810, %v809
    %v820 = vpack.c.b16 %v812, %v811
    %829 = vmatprep.subr.bf16.mxu0 0
    %830 = vmatpush1.bf16.msra.mxu0 %v820
    %831 = vmatprep.subr.bf16.mxu0 0
    %832 = vmatpush1.bf16.msra.mxu0 %v819
    %833 = vmatprep.subr.bf16.mxu0 0
    %834 = vmatpush1.bf16.msra.mxu0 %v818
    %835 = vmatprep.subr.bf16.mxu0 0
    %836 = vmatpush1.bf16.msra.mxu0 %v817
    %837 = vmatprep.subr.bf16.mxu0 0
    %838 = vmatpush1.bf16.msra.mxu0 %v816
    %839 = vmatprep.subr.bf16.mxu0 0
    %840 = vmatpush1.bf16.msra.mxu0 %v815
    %841 = vmatprep.subr.bf16.mxu0 0
    %842 = vmatpush1.bf16.msra.mxu0 %v814
    %843 = vmatprep.subr.bf16.mxu0 0
    %844 = vmatpush1.bf16.msra.mxu0 %v813
    %845 = vmatprep.subr.bf16.mxu0 0
    %846 = vmatpush2.bf16.msra.mxu0 0
    %847 = vmatprep.subr.bf16.mxu0 0
    %848 = vmatpush2.bf16.msra.mxu0 0
    %849 = vmatprep.subr.bf16.mxu0 0
    %850 = vmatpush2.bf16.msra.mxu0 0
    %851 = vmatprep.subr.bf16.mxu0 0
    %852 = vmatpush2.bf16.msra.mxu0 0
    %853 = vmatprep.subr.bf16.mxu0 0
    %854 = vmatpush2.bf16.msra.mxu0 0
    %855 = vmatprep.subr.bf16.mxu0 0
    %856 = vmatpush2.bf16.msra.mxu0 0
    %857 = vmatprep.subr.bf16.mxu0 0
    %858 = vmatpush2.bf16.msra.mxu0 0
    %859 = vmatprep.subr.bf16.mxu0 0
    %860 = vmatpush2.bf16.msra.mxu0 0
    %861 = vmatprep.mubr.bf16.mxu0 0
    %862 = vmatmul.mubr.bf16.gmra.mxu0 %v726
    %v863 = vpop.f32.mrf.mxu0
    %v864 = vadd.f32 0.0, %v863
    %v865 = vpop.f32.mrf.mxu0
    %v866 = vpop.f32.mrf.mxu0
    %v867 = vadd.f32 0.0, %v866
    %v868 = vpop.f32.mrf.mxu0
    %869 = vmatprep.mubr.bf16.mxu0 0
    %870 = vmatmul.mubr.bf16.gmra.mxu0 %v727
    %v871 = vpop.f32.mrf.mxu0
    %v872 = vadd.f32 0.0, %v871
    %v873 = vpop.f32.mrf.mxu0
    %v874 = vpop.f32.mrf.mxu0
    %v875 = vadd.f32 0.0, %v874
    %v876 = vpop.f32.mrf.mxu0
    %877 = vdwg.mxu0
    %v894 = vunpack.c.l.b16 %v763
    %v895 = vunpack.c.l.b16 %v764
    %v896 = vunpack.c.l.b16 %v765
    %v897 = vunpack.c.l.b16 %v766
    %v898 = vunpack.c.l.b16 %v767
    %v899 = vunpack.c.l.b16 %v768
    %v900 = vunpack.c.l.b16 %v769
    %v901 = vunpack.c.l.b16 %v770
    %v902 = vunpack.c.l.b16 %v771
    %v903 = vunpack.c.l.b16 %v772
    %v904 = vunpack.c.l.b16 %v773
    %v905 = vunpack.c.l.b16 %v774
    %v906 = vunpack.c.l.b16 %v775
    %v907 = vunpack.c.l.b16 %v776
    %v908 = vunpack.c.l.b16 %v777
    %v909 = vunpack.c.l.b16 %v778
    %v910 = vpack.c.b16 %v895, %v894
    %v911 = vpack.c.b16 %v897, %v896
    %v912 = vpack.c.b16 %v899, %v898
    %v913 = vpack.c.b16 %v901, %v900
    %v914 = vpack.c.b16 %v903, %v902
    %v915 = vpack.c.b16 %v905, %v904
    %v916 = vpack.c.b16 %v907, %v906
    %v917 = vpack.c.b16 %v909, %v908
    %926 = vmatprep.subr.bf16.mxu0 0
    %927 = vmatpush1.bf16.msra.mxu0 %v917
    %928 = vmatprep.subr.bf16.mxu0 0
    %929 = vmatpush1.bf16.msra.mxu0 %v916
    %930 = vmatprep.subr.bf16.mxu0 0
    %931 = vmatpush1.bf16.msra.mxu0 %v915
    %932 = vmatprep.subr.bf16.mxu0 0
    %933 = vmatpush1.bf16.msra.mxu0 %v914
    %934 = vmatprep.subr.bf16.mxu0 0
    %935 = vmatpush1.bf16.msra.mxu0 %v913
    %936 = vmatprep.subr.bf16.mxu0 0
    %937 = vmatpush1.bf16.msra.mxu0 %v912
    %938 = vmatprep.subr.bf16.mxu0 0
    %939 = vmatpush1.bf16.msra.mxu0 %v911
    %940 = vmatprep.subr.bf16.mxu0 0
    %941 = vmatpush1.bf16.msra.mxu0 %v910
    %942 = vmatprep.subr.bf16.mxu0 0
    %943 = vmatpush2.bf16.msra.mxu0 0
    %944 = vmatprep.subr.bf16.mxu0 0
    %945 = vmatpush2.bf16.msra.mxu0 0
    %946 = vmatprep.subr.bf16.mxu0 0
    %947 = vmatpush2.bf16.msra.mxu0 0
    %948 = vmatprep.subr.bf16.mxu0 0
    %949 = vmatpush2.bf16.msra.mxu0 0
    %950 = vmatprep.subr.bf16.mxu0 0
    %951 = vmatpush2.bf16.msra.mxu0 0
    %952 = vmatprep.subr.bf16.mxu0 0
    %953 = vmatpush2.bf16.msra.mxu0 0
    %954 = vmatprep.subr.bf16.mxu0 0
    %955 = vmatpush2.bf16.msra.mxu0 0
    %956 = vmatprep.subr.bf16.mxu0 0
    %957 = vmatpush2.bf16.msra.mxu0 0
    %958 = vmatprep.mubr.bf16.mxu0 0
    %959 = vmatmul.mubr.bf16.gmra.mxu0 %v726
    %v960 = vpop.f32.mrf.mxu0
    %v961 = vadd.f32 0.0, %v960
    %v962 = vpop.f32.mrf.mxu0
    %v963 = vpop.f32.mrf.mxu0
    %v964 = vadd.f32 0.0, %v963
    %v965 = vpop.f32.mrf.mxu0
    %966 = vmatprep.mubr.bf16.mxu0 0
    %967 = vmatmul.mubr.bf16.gmra.mxu0 %v727
    %v968 = vpop.f32.mrf.mxu0
    %v969 = vadd.f32 0.0, %v968
    %v970 = vpop.f32.mrf.mxu0
    %v971 = vpop.f32.mrf.mxu0
    %v972 = vadd.f32 0.0, %v971
    %v973 = vpop.f32.mrf.mxu0
    %974 = vdwg.mxu0
    %v976 = vlaneseq
    %v977 = vshrl.u32 %v976, 7
    %v978 = vsub.s32 0, %v977
    %v979 = vrot.slane %v780, %v978
    %v997 = vunpack.c.l.b16 %v746
    %v998 = vunpack.c.l.b16 %v747
    %v999 = vunpack.c.l.b16 %v748
    %v1000 = vunpack.c.l.b16 %v749
    %v1001 = vunpack.c.l.b16 %v750
    %v1002 = vunpack.c.l.b16 %v751
    %v1003 = vunpack.c.l.b16 %v752
    %v1004 = vunpack.c.l.b16 %v753
    %v1005 = vunpack.c.l.b16 %v754
    %v1006 = vunpack.c.l.b16 %v755
    %v1007 = vunpack.c.l.b16 %v756
    %v1008 = vunpack.c.l.b16 %v757
    %v1009 = vunpack.c.l.b16 %v758
    %v1010 = vunpack.c.l.b16 %v759
    %v1011 = vunpack.c.l.b16 %v760
    %v1012 = vunpack.c.l.b16 %v761
    %v1013 = vpack.c.b16 %v998, %v997
    %v1014 = vpack.c.b16 %v1000, %v999
    %v1015 = vpack.c.b16 %v1002, %v1001
    %v1016 = vpack.c.b16 %v1004, %v1003
    %v1017 = vpack.c.b16 %v1006, %v1005
    %v1018 = vpack.c.b16 %v1008, %v1007
    %v1019 = vpack.c.b16 %v1010, %v1009
    %v1020 = vpack.c.b16 %v1012, %v1011
    %1029 = vmatprep.subr.bf16.mxu0 0
    %1030 = vmatpush1.bf16.msra.mxu0 %v1020
    %1031 = vmatprep.subr.bf16.mxu0 0
    %1032 = vmatpush1.bf16.msra.mxu0 %v1019
    %1033 = vmatprep.subr.bf16.mxu0 0
    %1034 = vmatpush1.bf16.msra.mxu0 %v1018
    %1035 = vmatprep.subr.bf16.mxu0 0
    %1036 = vmatpush1.bf16.msra.mxu0 %v1017
    %1037 = vmatprep.subr.bf16.mxu0 0
    %1038 = vmatpush1.bf16.msra.mxu0 %v1016
    %1039 = vmatprep.subr.bf16.mxu0 0
    %1040 = vmatpush1.bf16.msra.mxu0 %v1015
    %1041 = vmatprep.subr.bf16.mxu0 0
    %1042 = vmatpush1.bf16.msra.mxu0 %v1014
    %1043 = vmatprep.subr.bf16.mxu0 0
    %1044 = vmatpush1.bf16.msra.mxu0 %v1013
    %1045 = vmatprep.subr.bf16.mxu0 0
    %1046 = vmatpush2.bf16.msra.mxu0 0
    %1047 = vmatprep.subr.bf16.mxu0 0
    %1048 = vmatpush2.bf16.msra.mxu0 0
    %1049 = vmatprep.subr.bf16.mxu0 0
    %1050 = vmatpush2.bf16.msra.mxu0 0
    %1051 = vmatprep.subr.bf16.mxu0 0
    %1052 = vmatpush2.bf16.msra.mxu0 0
    %1053 = vmatprep.subr.bf16.mxu0 0
    %1054 = vmatpush2.bf16.msra.mxu0 0
    %1055 = vmatprep.subr.bf16.mxu0 0
    %1056 = vmatpush2.bf16.msra.mxu0 0
    %1057 = vmatprep.subr.bf16.mxu0 0
    %1058 = vmatpush2.bf16.msra.mxu0 0
    %1059 = vmatprep.subr.bf16.mxu0 0
    %1060 = vmatpush2.bf16.msra.mxu0 0
    %1061 = vmatprep.mubr.bf16.mxu0 0
    %1062 = vmatmul.mubr.bf16.gmra.mxu0 %v726
    %v1063 = vpop.f32.mrf.mxu0
    %v1064 = vadd.f32 %v979, %v1063
    %v1065 = vpop.f32.mrf.mxu0
    %v1066 = vpop.f32.mrf.mxu0
    %v1067 = vadd.f32 %v979, %v1066
    %v1068 = vpop.f32.mrf.mxu0
    %1069 = vmatprep.mubr.bf16.mxu0 0
    %1070 = vmatmul.mubr.bf16.gmra.mxu0 %v727
    %v1071 = vpop.f32.mrf.mxu0
    %v1072 = vadd.f32 %v979, %v1071
    %v1073 = vpop.f32.mrf.mxu0
    %v1074 = vpop.f32.mrf.mxu0
    %v1075 = vadd.f32 %v979, %v1074
    %v1076 = vpop.f32.mrf.mxu0
    %1077 = vdwg.mxu0
    %v1078 = vrot.slane %v864, 7
    %v1079 = vrot.slane %v867, 7
    %v1080 = vrot.slane %v872, 7
    %v1081 = vrot.slane %v875, 7
    %v1082 = vsel %vm306, %v1080, %v1081
    %v1083 = vsel %vm306, %v1079, %v1080
    %v1084 = vsel %vm306, %v1078, %v1079
    %v1085 = vsel %vm306, %v1081, %v1078
    %v1086 = vsel %vm101, %v1085, 0.0
    %v1087 = vsel %vm102, %v1084, 0.0
    %v1088 = vsel %vm103, %v1083, 0.0
    %v1089 = vsel %vm104, %v1082, 0.0
    %v1090 = vadd.f32 %v1064, %v1086
    %v1091 = vadd.f32 %v1067, %v1087
    %v1092 = vadd.f32 %v1072, %v1088
    %v1093 = vadd.f32 %v1075, %v1089
    %v1094 = vrot.slane %v961, 1
    %v1095 = vrot.slane %v964, 1
    %v1096 = vrot.slane %v969, 1
    %v1097 = vrot.slane %v972, 1
    %v1098 = vsel %vm323, %v1096, %v1097
    %v1099 = vsel %vm323, %v1095, %v1096
    %v1100 = vsel %vm323, %v1094, %v1095
    %v1101 = vsel %vm323, %v1097, %v1094
    %v1102 = vsel %vm105, %v1100, 0.0
    %v1103 = vsel %vm106, %v1099, 0.0
    %v1104 = vsel %vm107, %v1098, 0.0
    %v1105 = vsel %vm108, %v1101, 0.0
    %v1106 = vadd.f32 %v1090, %v1102
    %v1107 = vadd.f32 %v1091, %v1103
    %v1108 = vadd.f32 %v1092, %v1104
    %v1109 = vadd.f32 %v1093, %v1105
    %v1110 = vmax.f32 %v1106, 0.0
    %v1111 = vmax.f32 %v1107, 0.0
    %v1112 = vmax.f32 %v1108, 0.0
    %v1113 = vmax.f32 %v1109, 0.0
    %v1114 = vpack.c.bf16 %v1111, %v1110
    %v1115 = vpack.c.bf16 %v1113, %v1112
    %s1116 = scalar_lea.vmem [#allocation2], 384
    %v1117 = vld [vmem:[%s1116] sm:$0xf]
    %v1118 = vld [vmem:[%s1116 + $0x4] sm:$0xf]
    %v1119 = vld [vmem:[%s1116 + $0x8] sm:$0xf]
    %v1120 = vld [vmem:[%s1116 + $0xc] sm:$0xf]
    %v1121 = vld [vmem:[%s1116 + $0x10] sm:$0xf]
    %v1122 = vld [vmem:[%s1116 + $0x14] sm:$0xf]
    %v1123 = vld [vmem:[%s1116 + $0x18] sm:$0xf]
    %v1124 = vld [vmem:[%s1116 + $0x1c] sm:$0xf]
    %v1125 = vld [vmem:[%s1116 + $0x20] sm:$0xf]
    %v1126 = vld [vmem:[%s1116 + $0x24] sm:$0xf]
    %v1127 = vld [vmem:[%s1116 + $0x28] sm:$0xf]
    %v1128 = vld [vmem:[%s1116 + $0x2c] sm:$0xf]
    %v1129 = vld [vmem:[%s1116 + $0x30] sm:$0xf]
    %v1130 = vld [vmem:[%s1116 + $0x34] sm:$0xf]
    %v1131 = vld [vmem:[%s1116 + $0x38] sm:$0xf]
    %v1132 = vld [vmem:[%s1116 + $0x3c] sm:$0xf]
    %s1133 = scalar_lea.vmem [#allocation2], 448
    %v1134 = vld [vmem:[%s1133] sm:$0xf]
    %v1135 = vld [vmem:[%s1133 + $0x4] sm:$0xf]
    %v1136 = vld [vmem:[%s1133 + $0x8] sm:$0xf]
    %v1137 = vld [vmem:[%s1133 + $0xc] sm:$0xf]
    %v1138 = vld [vmem:[%s1133 + $0x10] sm:$0xf]
    %v1139 = vld [vmem:[%s1133 + $0x14] sm:$0xf]
    %v1140 = vld [vmem:[%s1133 + $0x18] sm:$0xf]
    %v1141 = vld [vmem:[%s1133 + $0x1c] sm:$0xf]
    %v1142 = vld [vmem:[%s1133 + $0x20] sm:$0xf]
    %v1143 = vld [vmem:[%s1133 + $0x24] sm:$0xf]
    %v1144 = vld [vmem:[%s1133 + $0x28] sm:$0xf]
    %v1145 = vld [vmem:[%s1133 + $0x2c] sm:$0xf]
    %v1146 = vld [vmem:[%s1133 + $0x30] sm:$0xf]
    %v1147 = vld [vmem:[%s1133 + $0x34] sm:$0xf]
    %v1148 = vld [vmem:[%s1133 + $0x38] sm:$0xf]
    %v1149 = vld [vmem:[%s1133 + $0x3c] sm:$0xf]
    %s1150 = scalar_lea.vmem [#allocation2], 512
    %v1151 = vld [vmem:[%s1150] sm:$0xf]
    %v1152 = vld [vmem:[%s1150 + $0x4] sm:$0xf]
    %v1153 = vld [vmem:[%s1150 + $0x8] sm:$0xf]
    %v1154 = vld [vmem:[%s1150 + $0xc] sm:$0xf]
    %v1155 = vld [vmem:[%s1150 + $0x10] sm:$0xf]
    %v1156 = vld [vmem:[%s1150 + $0x14] sm:$0xf]
    %v1157 = vld [vmem:[%s1150 + $0x18] sm:$0xf]
    %v1158 = vld [vmem:[%s1150 + $0x1c] sm:$0xf]
    %v1159 = vld [vmem:[%s1150 + $0x20] sm:$0xf]
    %v1160 = vld [vmem:[%s1150 + $0x24] sm:$0xf]
    %v1161 = vld [vmem:[%s1150 + $0x28] sm:$0xf]
    %v1162 = vld [vmem:[%s1150 + $0x2c] sm:$0xf]
    %v1163 = vld [vmem:[%s1150 + $0x30] sm:$0xf]
    %v1164 = vld [vmem:[%s1150 + $0x34] sm:$0xf]
    %v1165 = vld [vmem:[%s1150 + $0x38] sm:$0xf]
    %v1166 = vld [vmem:[%s1150 + $0x3c] sm:$0xf]
    %s1167 = scalar_lea.vmem %s4, 2
    %v1168 = vld [vmem:[%s1167] sm:$0x1]
    %v1185 = vunpack.c.l.b16 %v1117
    %v1186 = vunpack.c.l.b16 %v1118
    %v1187 = vunpack.c.l.b16 %v1119
    %v1188 = vunpack.c.l.b16 %v1120
    %v1189 = vunpack.c.l.b16 %v1121
    %v1190 = vunpack.c.l.b16 %v1122
    %v1191 = vunpack.c.l.b16 %v1123
    %v1192 = vunpack.c.l.b16 %v1124
    %v1193 = vunpack.c.l.b16 %v1125
    %v1194 = vunpack.c.l.b16 %v1126
    %v1195 = vunpack.c.l.b16 %v1127
    %v1196 = vunpack.c.l.b16 %v1128
    %v1197 = vunpack.c.l.b16 %v1129
    %v1198 = vunpack.c.l.b16 %v1130
    %v1199 = vunpack.c.l.b16 %v1131
    %v1200 = vunpack.c.l.b16 %v1132
    %v1201 = vpack.c.b16 %v1186, %v1185
    %v1202 = vpack.c.b16 %v1188, %v1187
    %v1203 = vpack.c.b16 %v1190, %v1189
    %v1204 = vpack.c.b16 %v1192, %v1191
    %v1205 = vpack.c.b16 %v1194, %v1193
    %v1206 = vpack.c.b16 %v1196, %v1195
    %v1207 = vpack.c.b16 %v1198, %v1197
    %v1208 = vpack.c.b16 %v1200, %v1199
    %1217 = vmatprep.subr.bf16.mxu0 0
    %1218 = vmatpush1.bf16.msra.mxu0 %v1208
    %1219 = vmatprep.subr.bf16.mxu0 0
    %1220 = vmatpush1.bf16.msra.mxu0 %v1207
    %1221 = vmatprep.subr.bf16.mxu0 0
    %1222 = vmatpush1.bf16.msra.mxu0 %v1206
    %1223 = vmatprep.subr.bf16.mxu0 0
    %1224 = vmatpush1.bf16.msra.mxu0 %v1205
    %1225 = vmatprep.subr.bf16.mxu0 0
    %1226 = vmatpush1.bf16.msra.mxu0 %v1204
    %1227 = vmatprep.subr.bf16.mxu0 0
    %1228 = vmatpush1.bf16.msra.mxu0 %v1203
    %1229 = vmatprep.subr.bf16.mxu0 0
    %1230 = vmatpush1.bf16.msra.mxu0 %v1202
    %1231 = vmatprep.subr.bf16.mxu0 0
    %1232 = vmatpush1.bf16.msra.mxu0 %v1201
    %1233 = vmatprep.subr.bf16.mxu0 0
    %1234 = vmatpush2.bf16.msra.mxu0 0
    %1235 = vmatprep.subr.bf16.mxu0 0
    %1236 = vmatpush2.bf16.msra.mxu0 0
    %1237 = vmatprep.subr.bf16.mxu0 0
    %1238 = vmatpush2.bf16.msra.mxu0 0
    %1239 = vmatprep.subr.bf16.mxu0 0
    %1240 = vmatpush2.bf16.msra.mxu0 0
    %1241 = vmatprep.subr.bf16.mxu0 0
    %1242 = vmatpush2.bf16.msra.mxu0 0
    %1243 = vmatprep.subr.bf16.mxu0 0
    %1244 = vmatpush2.bf16.msra.mxu0 0
    %1245 = vmatprep.subr.bf16.mxu0 0
    %1246 = vmatpush2.bf16.msra.mxu0 0
    %1247 = vmatprep.subr.bf16.mxu0 0
    %1248 = vmatpush2.bf16.msra.mxu0 0
    %1249 = vmatprep.mubr.bf16.mxu0 0
    %1250 = vmatmul.mubr.bf16.gmra.mxu0 %v1114
    %v1251 = vpop.f32.mrf.mxu0
    %v1252 = vadd.f32 0.0, %v1251
    %v1253 = vpop.f32.mrf.mxu0
    %v1254 = vpop.f32.mrf.mxu0
    %v1255 = vadd.f32 0.0, %v1254
    %v1256 = vpop.f32.mrf.mxu0
    %1257 = vmatprep.mubr.bf16.mxu0 0
    %1258 = vmatmul.mubr.bf16.gmra.mxu0 %v1115
    %v1259 = vpop.f32.mrf.mxu0
    %v1260 = vadd.f32 0.0, %v1259
    %v1261 = vpop.f32.mrf.mxu0
    %v1262 = vpop.f32.mrf.mxu0
    %v1263 = vadd.f32 0.0, %v1262
    %v1264 = vpop.f32.mrf.mxu0
    %1265 = vdwg.mxu0
    %v1282 = vunpack.c.l.b16 %v1151
    %v1283 = vunpack.c.l.b16 %v1152
    %v1284 = vunpack.c.l.b16 %v1153
    %v1285 = vunpack.c.l.b16 %v1154
    %v1286 = vunpack.c.l.b16 %v1155
    %v1287 = vunpack.c.l.b16 %v1156
    %v1288 = vunpack.c.l.b16 %v1157
    %v1289 = vunpack.c.l.b16 %v1158
    %v1290 = vunpack.c.l.b16 %v1159
    %v1291 = vunpack.c.l.b16 %v1160
    %v1292 = vunpack.c.l.b16 %v1161
    %v1293 = vunpack.c.l.b16 %v1162
    %v1294 = vunpack.c.l.b16 %v1163
    %v1295 = vunpack.c.l.b16 %v1164
    %v1296 = vunpack.c.l.b16 %v1165
    %v1297 = vunpack.c.l.b16 %v1166
    %v1298 = vpack.c.b16 %v1283, %v1282
    %v1299 = vpack.c.b16 %v1285, %v1284
    %v1300 = vpack.c.b16 %v1287, %v1286
    %v1301 = vpack.c.b16 %v1289, %v1288
    %v1302 = vpack.c.b16 %v1291, %v1290
    %v1303 = vpack.c.b16 %v1293, %v1292
    %v1304 = vpack.c.b16 %v1295, %v1294
    %v1305 = vpack.c.b16 %v1297, %v1296
    %1314 = vmatprep.subr.bf16.mxu0 0
    %1315 = vmatpush1.bf16.msra.mxu0 %v1305
    %1316 = vmatprep.subr.bf16.mxu0 0
    %1317 = vmatpush1.bf16.msra.mxu0 %v1304
    %1318 = vmatprep.subr.bf16.mxu0 0
    %1319 = vmatpush1.bf16.msra.mxu0 %v1303
    %1320 = vmatprep.subr.bf16.mxu0 0
    %1321 = vmatpush1.bf16.msra.mxu0 %v1302
    %1322 = vmatprep.subr.bf16.mxu0 0
    %1323 = vmatpush1.bf16.msra.mxu0 %v1301
    %1324 = vmatprep.subr.bf16.mxu0 0
    %1325 = vmatpush1.bf16.msra.mxu0 %v1300
    %1326 = vmatprep.subr.bf16.mxu0 0
    %1327 = vmatpush1.bf16.msra.mxu0 %v1299
    %1328 = vmatprep.subr.bf16.mxu0 0
    %1329 = vmatpush1.bf16.msra.mxu0 %v1298
    %1330 = vmatprep.subr.bf16.mxu0 0
    %1331 = vmatpush2.bf16.msra.mxu0 0
    %1332 = vmatprep.subr.bf16.mxu0 0
    %1333 = vmatpush2.bf16.msra.mxu0 0
    %1334 = vmatprep.subr.bf16.mxu0 0
    %1335 = vmatpush2.bf16.msra.mxu0 0
    %1336 = vmatprep.subr.bf16.mxu0 0
    %1337 = vmatpush2.bf16.msra.mxu0 0
    %1338 = vmatprep.subr.bf16.mxu0 0
    %1339 = vmatpush2.bf16.msra.mxu0 0
    %1340 = vmatprep.subr.bf16.mxu0 0
    %1341 = vmatpush2.bf16.msra.mxu0 0
    %1342 = vmatprep.subr.bf16.mxu0 0
    %1343 = vmatpush2.bf16.msra.mxu0 0
    %1344 = vmatprep.subr.bf16.mxu0 0
    %1345 = vmatpush2.bf16.msra.mxu0 0
    %1346 = vmatprep.mubr.bf16.mxu0 0
    %1347 = vmatmul.mubr.bf16.gmra.mxu0 %v1114
    %v1348 = vpop.f32.mrf.mxu0
    %v1349 = vadd.f32 0.0, %v1348
    %v1350 = vpop.f32.mrf.mxu0
    %v1351 = vpop.f32.mrf.mxu0
    %v1352 = vadd.f32 0.0, %v1351
    %v1353 = vpop.f32.mrf.mxu0
    %1354 = vmatprep.mubr.bf16.mxu0 0
    %1355 = vmatmul.mubr.bf16.gmra.mxu0 %v1115
    %v1356 = vpop.f32.mrf.mxu0
    %v1357 = vadd.f32 0.0, %v1356
    %v1358 = vpop.f32.mrf.mxu0
    %v1359 = vpop.f32.mrf.mxu0
    %v1360 = vadd.f32 0.0, %v1359
    %v1361 = vpop.f32.mrf.mxu0
    %1362 = vdwg.mxu0
    %v1364 = vlaneseq
    %v1365 = vshrl.u32 %v1364, 7
    %v1366 = vsub.s32 0, %v1365
    %v1367 = vrot.slane %v1168, %v1366
    %v1385 = vunpack.c.l.b16 %v1134
    %v1386 = vunpack.c.l.b16 %v1135
    %v1387 = vunpack.c.l.b16 %v1136
    %v1388 = vunpack.c.l.b16 %v1137
    %v1389 = vunpack.c.l.b16 %v1138
    %v1390 = vunpack.c.l.b16 %v1139
    %v1391 = vunpack.c.l.b16 %v1140
    %v1392 = vunpack.c.l.b16 %v1141
    %v1393 = vunpack.c.l.b16 %v1142
    %v1394 = vunpack.c.l.b16 %v1143
    %v1395 = vunpack.c.l.b16 %v1144
    %v1396 = vunpack.c.l.b16 %v1145
    %v1397 = vunpack.c.l.b16 %v1146
    %v1398 = vunpack.c.l.b16 %v1147
    %v1399 = vunpack.c.l.b16 %v1148
    %v1400 = vunpack.c.l.b16 %v1149
    %v1401 = vpack.c.b16 %v1386, %v1385
    %v1402 = vpack.c.b16 %v1388, %v1387
    %v1403 = vpack.c.b16 %v1390, %v1389
    %v1404 = vpack.c.b16 %v1392, %v1391
    %v1405 = vpack.c.b16 %v1394, %v1393
    %v1406 = vpack.c.b16 %v1396, %v1395
    %v1407 = vpack.c.b16 %v1398, %v1397
    %v1408 = vpack.c.b16 %v1400, %v1399
    %1417 = vmatprep.subr.bf16.mxu0 0
    %1418 = vmatpush1.bf16.msra.mxu0 %v1408
    %1419 = vmatprep.subr.bf16.mxu0 0
    %1420 = vmatpush1.bf16.msra.mxu0 %v1407
    %1421 = vmatprep.subr.bf16.mxu0 0
    %1422 = vmatpush1.bf16.msra.mxu0 %v1406
    %1423 = vmatprep.subr.bf16.mxu0 0
    %1424 = vmatpush1.bf16.msra.mxu0 %v1405
    %1425 = vmatprep.subr.bf16.mxu0 0
    %1426 = vmatpush1.bf16.msra.mxu0 %v1404
    %1427 = vmatprep.subr.bf16.mxu0 0
    %1428 = vmatpush1.bf16.msra.mxu0 %v1403
    %1429 = vmatprep.subr.bf16.mxu0 0
    %1430 = vmatpush1.bf16.msra.mxu0 %v1402
    %1431 = vmatprep.subr.bf16.mxu0 0
    %1432 = vmatpush1.bf16.msra.mxu0 %v1401
    %1433 = vmatprep.subr.bf16.mxu0 0
    %1434 = vmatpush2.bf16.msra.mxu0 0
    %1435 = vmatprep.subr.bf16.mxu0 0
    %1436 = vmatpush2.bf16.msra.mxu0 0
    %1437 = vmatprep.subr.bf16.mxu0 0
    %1438 = vmatpush2.bf16.msra.mxu0 0
    %1439 = vmatprep.subr.bf16.mxu0 0
    %1440 = vmatpush2.bf16.msra.mxu0 0
    %1441 = vmatprep.subr.bf16.mxu0 0
    %1442 = vmatpush2.bf16.msra.mxu0 0
    %1443 = vmatprep.subr.bf16.mxu0 0
    %1444 = vmatpush2.bf16.msra.mxu0 0
    %1445 = vmatprep.subr.bf16.mxu0 0
    %1446 = vmatpush2.bf16.msra.mxu0 0
    %1447 = vmatprep.subr.bf16.mxu0 0
    %1448 = vmatpush2.bf16.msra.mxu0 0
    %1449 = vmatprep.mubr.bf16.mxu0 0
    %1450 = vmatmul.mubr.bf16.gmra.mxu0 %v1114
    %v1451 = vpop.f32.mrf.mxu0
    %v1452 = vadd.f32 %v1367, %v1451
    %v1453 = vpop.f32.mrf.mxu0
    %v1454 = vpop.f32.mrf.mxu0
    %v1455 = vadd.f32 %v1367, %v1454
    %v1456 = vpop.f32.mrf.mxu0
    %1457 = vmatprep.mubr.bf16.mxu0 0
    %1458 = vmatmul.mubr.bf16.gmra.mxu0 %v1115
    %v1459 = vpop.f32.mrf.mxu0
    %v1460 = vadd.f32 %v1367, %v1459
    %v1461 = vpop.f32.mrf.mxu0
    %v1462 = vpop.f32.mrf.mxu0
    %v1463 = vadd.f32 %v1367, %v1462
    %v1464 = vpop.f32.mrf.mxu0
    %1465 = vdwg.mxu0
    %v1466 = vrot.slane %v1252, 7
    %v1467 = vrot.slane %v1255, 7
    %v1468 = vrot.slane %v1260, 7
    %v1469 = vrot.slane %v1263, 7
    %v1470 = vsel %vm306, %v1468, %v1469
    %v1471 = vsel %vm306, %v1467, %v1468
    %v1472 = vsel %vm306, %v1466, %v1467
    %v1473 = vsel %vm306, %v1469, %v1466
    %v1474 = vsel %vm101, %v1473, 0.0
    %v1475 = vsel %vm102, %v1472, 0.0
    %v1476 = vsel %vm103, %v1471, 0.0
    %v1477 = vsel %vm104, %v1470, 0.0
    %v1478 = vadd.f32 %v1452, %v1474
    %v1479 = vadd.f32 %v1455, %v1475
    %v1480 = vadd.f32 %v1460, %v1476
    %v1481 = vadd.f32 %v1463, %v1477
    %v1482 = vrot.slane %v1349, 1
    %v1483 = vrot.slane %v1352, 1
    %v1484 = vrot.slane %v1357, 1
    %v1485 = vrot.slane %v1360, 1
    %v1486 = vsel %vm323, %v1484, %v1485
    %v1487 = vsel %vm323, %v1483, %v1484
    %v1488 = vsel %vm323, %v1482, %v1483
    %v1489 = vsel %vm323, %v1485, %v1482
    %v1490 = vsel %vm105, %v1488, 0.0
    %v1491 = vsel %vm106, %v1487, 0.0
    %v1492 = vsel %vm107, %v1486, 0.0
    %v1493 = vsel %vm108, %v1489, 0.0
    %v1494 = vadd.f32 %v1478, %v1490
    %v1495 = vadd.f32 %v1479, %v1491
    %v1496 = vadd.f32 %v1480, %v1492
    %v1497 = vadd.f32 %v1481, %v1493
    %v1498 = vmax.f32 %v1494, 0.0
    %v1499 = vmax.f32 %v1495, 0.0
    %v1500 = vmax.f32 %v1496, 0.0
    %v1501 = vmax.f32 %v1497, 0.0
    %v1502 = vpack.c.bf16 %v1499, %v1498
    %v1503 = vpack.c.bf16 %v1501, %v1500
    %v1504 = vunpack.c.l.bf16 %v1502
    %v1505 = vunpack.c.h.bf16 %v1502
    %v1506 = vunpack.c.l.bf16 %v1503
    %v1507 = vunpack.c.h.bf16 %v1503
    %v1508 = vadd.f32 %v1504, %v1505
    %v1509 = vrot.slane %v1508, 4
    %v1510 = vadd.f32 %v1508, %v1509
    %v1511 = vrot.slane %v1510, 2
    %v1512 = vadd.f32 %v1510, %v1511
    %v1513 = vrot.slane %v1512, 1
    %v1514 = vadd.f32 %v1512, %v1513
    %v1515 = vadd.f32 %v1506, %v1507
    %v1516 = vrot.slane %v1515, 4
    %v1517 = vadd.f32 %v1515, %v1516
    %v1518 = vrot.slane %v1517, 2
    %v1519 = vadd.f32 %v1517, %v1518
    %v1520 = vrot.slane %v1519, 1
    %v1521 = vadd.f32 %v1519, %v1520
    %v1522 = vmul.f32 %v1514, 0.0625
    %v1523 = vmul.f32 %v1521, 0.0625
    %v1524 = vpack.c.bf16 %v1522, %v1522
    %v1525 = vpack.c.bf16 %v1523, %v1523
    %v1526 = vld [vmem:[%s5] sm:$0xf]
    %v1527 = vld [vmem:[%s5 + $0x4] sm:$0xf]
    %v1528 = vld [vmem:[%s5 + $0x8] sm:$0xf]
    %v1529 = vld [vmem:[%s5 + $0xc] sm:$0xf]
    %v1530 = vld [vmem:[%s5 + $0x10] sm:$0xf]
    %v1531 = vld [vmem:[%s5 + $0x14] sm:$0xf]
    %v1532 = vld [vmem:[%s5 + $0x18] sm:$0xf]
    %v1533 = vld [vmem:[%s5 + $0x1c] sm:$0xf]
    %v1534 = vld [vmem:[%s5 + $0x20] sm:$0xf]
    %v1535 = vld [vmem:[%s5 + $0x24] sm:$0xf]
    %v1536 = vld [vmem:[%s5 + $0x28] sm:$0xf]
    %v1537 = vld [vmem:[%s5 + $0x2c] sm:$0xf]
    %v1538 = vld [vmem:[%s5 + $0x30] sm:$0xf]
    %v1539 = vld [vmem:[%s5 + $0x34] sm:$0xf]
    %v1540 = vld [vmem:[%s5 + $0x38] sm:$0xf]
    %v1541 = vld [vmem:[%s5 + $0x3c] sm:$0xf]
    %v1542 = vld [vmem:[%s6] sm:$0x1]
    %v1544 = vlaneseq
    %v1545 = vshrl.u32 %v1544, 7
    %v1546 = vsub.s32 0, %v1545
    %v1547 = vrot.slane %v1542, %v1546
    %v1551 = vunpack.c.l.b16 %v1524
    %v1552 = vunpack.c.l.b16 %v1525
    %vm1553 = vcmask 1041409
    %v1554 = vsel %vm1553, %v1552, %v1551
    %v1555 = vpack.c.b16 %v1554, %v1554
    %v1573 = vunpack.c.l.b16 %v1526
    %v1574 = vunpack.c.l.b16 %v1527
    %v1575 = vunpack.c.l.b16 %v1528
    %v1576 = vunpack.c.l.b16 %v1529
    %v1577 = vunpack.c.l.b16 %v1530
    %v1578 = vunpack.c.l.b16 %v1531
    %v1579 = vunpack.c.l.b16 %v1532
    %v1580 = vunpack.c.l.b16 %v1533
    %v1581 = vunpack.c.l.b16 %v1534
    %v1582 = vunpack.c.l.b16 %v1535
    %v1583 = vunpack.c.l.b16 %v1536
    %v1584 = vunpack.c.l.b16 %v1537
    %v1585 = vunpack.c.l.b16 %v1538
    %v1586 = vunpack.c.l.b16 %v1539
    %v1587 = vunpack.c.l.b16 %v1540
    %v1588 = vunpack.c.l.b16 %v1541
    %v1589 = vpack.c.b16 %v1574, %v1573
    %v1590 = vpack.c.b16 %v1576, %v1575
    %v1591 = vpack.c.b16 %v1578, %v1577
    %v1592 = vpack.c.b16 %v1580, %v1579
    %v1593 = vpack.c.b16 %v1582, %v1581
    %v1594 = vpack.c.b16 %v1584, %v1583
    %v1595 = vpack.c.b16 %v1586, %v1585
    %v1596 = vpack.c.b16 %v1588, %v1587
    %1605 = vmatprep.subr.bf16.mxu0 0
    %1606 = vmatpush1.bf16.msra.mxu0 %v1596
    %1607 = vmatprep.subr.bf16.mxu0 0
    %1608 = vmatpush1.bf16.msra.mxu0 %v1595
    %1609 = vmatprep.subr.bf16.mxu0 0
    %1610 = vmatpush1.bf16.msra.mxu0 %v1594
    %1611 = vmatprep.subr.bf16.mxu0 0
    %1612 = vmatpush1.bf16.msra.mxu0 %v1593
    %1613 = vmatprep.subr.bf16.mxu0 0
    %1614 = vmatpush1.bf16.msra.mxu0 %v1592
    %1615 = vmatprep.subr.bf16.mxu0 0
    %1616 = vmatpush1.bf16.msra.mxu0 %v1591
    %1617 = vmatprep.subr.bf16.mxu0 0
    %1618 = vmatpush1.bf16.msra.mxu0 %v1590
    %1619 = vmatprep.subr.bf16.mxu0 0
    %1620 = vmatpush1.bf16.msra.mxu0 %v1589
    %1621 = vmatprep.subr.bf16.mxu0 0
    %1622 = vmatpush2.bf16.msra.mxu0 0
    %1623 = vmatprep.subr.bf16.mxu0 0
    %1624 = vmatpush2.bf16.msra.mxu0 0
    %1625 = vmatprep.subr.bf16.mxu0 0
    %1626 = vmatpush2.bf16.msra.mxu0 0
    %1627 = vmatprep.subr.bf16.mxu0 0
    %1628 = vmatpush2.bf16.msra.mxu0 0
    %1629 = vmatprep.subr.bf16.mxu0 0
    %1630 = vmatpush2.bf16.msra.mxu0 0
    %1631 = vmatprep.subr.bf16.mxu0 0
    %1632 = vmatpush2.bf16.msra.mxu0 0
    %1633 = vmatprep.subr.bf16.mxu0 0
    %1634 = vmatpush2.bf16.msra.mxu0 0
    %1635 = vmatprep.subr.bf16.mxu0 0
    %1636 = vmatpush2.bf16.msra.mxu0 0
    %1637 = vmatprep.mubr.bf16.mxu0 0
    %1638 = vmatmul.mubr.bf16.gmra.mxu0 %v1555
    %v1639 = vpop.f32.mrf.mxu0
    %v1640 = vadd.f32 %v1547, %v1639
    %v1641 = vpop.f32.mrf.mxu0
    %v1642 = vpop.f32.mrf.mxu0
    %v1643 = vpop.f32.mrf.mxu0
    %1644 = vdwg.mxu0
    %v1645 = vmax.f32 %v1640, 0.0
    %v1646 = vpack.c.bf16 %v1645, %v1645
    %v1647 = vld [vmem:[%s7] sm:$0xf]
    %v1648 = vld [vmem:[%s7 + $0x4] sm:$0xf]
    %v1649 = vld [vmem:[%s7 + $0x8] sm:$0xf]
    %v1650 = vld [vmem:[%s7 + $0xc] sm:$0xf]
    %v1651 = vld [vmem:[%s7 + $0x10] sm:$0xf]
    %v1652 = vld [vmem:[%s7 + $0x14] sm:$0xf]
    %v1653 = vld [vmem:[%s7 + $0x18] sm:$0xf]
    %v1654 = vld [vmem:[%s7 + $0x1c] sm:$0xf]
    %v1655 = vld [vmem:[%s8] sm:$0x1]
    %v1657 = vlaneseq
    %v1658 = vshrl.u32 %v1657, 7
    %v1659 = vsub.s32 0, %v1658
    %v1660 = vrot.slane %v1655, %v1659
    %v1670 = vunpack.c.l.b16 %v1647
    %v1671 = vunpack.c.l.b16 %v1648
    %v1672 = vunpack.c.l.b16 %v1649
    %v1673 = vunpack.c.l.b16 %v1650
    %v1674 = vunpack.c.l.b16 %v1651
    %v1675 = vunpack.c.l.b16 %v1652
    %v1676 = vunpack.c.l.b16 %v1653
    %v1677 = vunpack.c.l.b16 %v1654
    %v1678 = vpack.c.b16 %v1671, %v1670
    %v1679 = vpack.c.b16 %v1673, %v1672
    %v1680 = vpack.c.b16 %v1675, %v1674
    %v1681 = vpack.c.b16 %v1677, %v1676
    %vm1686 = vcmask 523264
    %v1688 = vsel %vm1686, %v1646, 0
    %1690 = vmatprep.subr.bf16.mxu0 0
    %1691 = vmatpush1.bf16.msra.mxu0 0
    %1692 = vmatprep.subr.bf16.mxu0 0
    %1693 = vmatpush1.bf16.msra.mxu0 0
    %1694 = vmatprep.subr.bf16.mxu0 0
    %1695 = vmatpush1.bf16.msra.mxu0 0
    %1696 = vmatprep.subr.bf16.mxu0 0
    %1697 = vmatpush1.bf16.msra.mxu0 0
    %1698 = vmatprep.subr.bf16.mxu0 0
    %1699 = vmatpush1.bf16.msra.mxu0 %v1681
    %1700 = vmatprep.subr.bf16.mxu0 0
    %1701 = vmatpush1.bf16.msra.mxu0 %v1680
    %1702 = vmatprep.subr.bf16.mxu0 0
    %1703 = vmatpush1.bf16.msra.mxu0 %v1679
    %1704 = vmatprep.subr.bf16.mxu0 0
    %1705 = vmatpush1.bf16.msra.mxu0 %v1678
    %1706 = vmatprep.subr.bf16.mxu0 0
    %1707 = vmatpush2.bf16.msra.mxu0 0
    %1708 = vmatprep.subr.bf16.mxu0 0
    %1709 = vmatpush2.bf16.msra.mxu0 0
    %1710 = vmatprep.subr.bf16.mxu0 0
    %1711 = vmatpush2.bf16.msra.mxu0 0
    %1712 = vmatprep.subr.bf16.mxu0 0
    %1713 = vmatpush2.bf16.msra.mxu0 0
    %1714 = vmatprep.subr.bf16.mxu0 0
    %1715 = vmatpush2.bf16.msra.mxu0 0
    %1716 = vmatprep.subr.bf16.mxu0 0
    %1717 = vmatpush2.bf16.msra.mxu0 0
    %1718 = vmatprep.subr.bf16.mxu0 0
    %1719 = vmatpush2.bf16.msra.mxu0 0
    %1720 = vmatprep.subr.bf16.mxu0 0
    %1721 = vmatpush2.bf16.msra.mxu0 0
    %1722 = vmatprep.mubr.bf16.mxu0 0
    %1723 = vmatmul.mubr.bf16.gmra.mxu0 %v1688
    %v1724 = vpop.f32.mrf.mxu0
    %v1725 = vadd.f32 %v1660, %v1724
    %v1726 = vpop.f32.mrf.mxu0
    %v1727 = vpop.f32.mrf.mxu0
    %v1728 = vpop.f32.mrf.mxu0
    %1729 = vdwg.mxu0
    %1730 = vst [vmem:[#allocation5] sm:$0x3] %v1725
    // Predicated region
    $region42: #{model3_forward.1} parent=1 // pred_check
      _
    $region43: #{model3_forward.1} parent=1 // pred_check_branch
      %1732 = sbr.rel (0) target = $region45
    $region44: #{model3_forward.1} parent=1 // pred_region
      %s1734 = ssub.s32 32, 32
      %1735 = vsyncadd [#allocation4], %s1734
      %s1737 = sshll.u32 [#allocation5], 4
      %s1738 = int_to_ptr.vmem [resolvable:$true] %s1737
      %1740 = dma.vmem_to_hbm [thread:$0]  %s1738, 32, %s9, [#allocation4]
    $region45: #{model3_forward.1} parent=1 // pred_fallthru
      _
    // Predicated region
    $region46: #{model3_forward.1} parent=1 // pred_check
      _
    $region47: #{model3_forward.1} parent=1 // pred_check_branch
      %1742 = sbr.rel (0) target = $region49
    $region48: #{model3_forward.1} parent=1 // pred_region
      %1743 = dma.done [#allocation4], 32
    $region49: #{model3_forward.1} parent=1 // pred_fallthru
      _
    %1744 = vsyncpa [#allocation3], 1
    %1745 = vsyncpa [#allocation4], 1

</llo_original>
